<compile_context>
chip_gen: v5e
topology: v5e:2x2
jax: 0.10.0
libtpu: 0.0.40
codegen_flags: <defaults>
</compile_context>

<pallas_src>
import functools
import jax
import jax.numpy as jnp
from jax import lax
from jax.experimental import pallas as pl
from jax.experimental.pallas import tpu as pltpu


# ------------------------------ tile helpers ---------------------------------

def _pick_tile(dim, target, align):
    """Largest tile <= target that is a multiple of `align` and divides `dim`;
    falls back to the full dim (single full block) when dim is small or awkward."""
    if dim <= target:
        return dim
    t = (target // align) * align
    while t >= align:
        if dim % t == 0:
            return t
        t -= align
    return dim


# ------------------------------ Pallas kernels --------------------------------

def _matmul_kernel(x_ref, w_ref, b_ref, o_ref, acc_ref, *, activation):
    # Tiled y = x @ w + b with f32 accumulation.
    # Grid = (M/tm, N/tn, K/tk); K is the innermost ("arbitrary") axis.
    @pl.when(pl.program_id(2) == 0)
    def _():
        acc_ref[...] = jnp.zeros_like(acc_ref)

    acc_ref[...] += jnp.dot(x_ref[...], w_ref[...],
                            preferred_element_type=jnp.float32)

    @pl.when(pl.program_id(2) == pl.num_programs(2) - 1)
    def _():
        y = acc_ref[...] + b_ref[...].astype(jnp.float32)
        if activation == "relu":
            y = jnp.maximum(y, 0.0)
        o_ref[...] = y.astype(o_ref.dtype)


def _attn_kernel(q_ref, kv_ref, o_ref, *, num_heads, scale):
    # q_ref: (1, tq, E), kv_ref: (1, Sk, 2E) [K | V], o_ref: (1, tq, E)
    # All heads handled inside the kernel with static lane slices, output stored
    # lane-dense in a single write (no HBM round-trips for head split/merge).
    E = q_ref.shape[-1]
    Dh = E // num_heads
    q = q_ref[0].astype(jnp.float32) * scale          # fold 1/sqrt(Dh) into Q once
    kv = kv_ref[0]
    outs = []
    for h in range(num_heads):
        qh = q[:, h * Dh:(h + 1) * Dh]                               # (tq, Dh)
        kh = kv[:, h * Dh:(h + 1) * Dh].astype(jnp.float32)          # (Sk, Dh)
        vh = kv[:, E + h * Dh:E + (h + 1) * Dh].astype(jnp.float32)  # (Sk, Dh)
        s = lax.dot_general(qh, kh, (((1,), (1,)), ((), ())),
                            preferred_element_type=jnp.float32)      # (tq, Sk)
        m = jnp.max(s, axis=-1, keepdims=True)
        p = jnp.exp(s - m)
        l = jnp.sum(p, axis=-1, keepdims=True)
        o = jnp.dot(p, vh, preferred_element_type=jnp.float32)
        outs.append(o * pl.reciprocal(l, approx=True))
    o_ref[0] = jnp.concatenate(outs, axis=-1).astype(o_ref.dtype)


def _add_ln_kernel(x_ref, r_ref, g_ref, b_ref, o_ref, *, eps):
    x = x_ref[...].astype(jnp.float32) + r_ref[...].astype(jnp.float32)
    mean = jnp.mean(x, axis=-1, keepdims=True)
    xc = x - mean
    var = jnp.mean(xc * xc, axis=-1, keepdims=True)
    y = xc * lax.rsqrt(var + eps)
    o_ref[...] = (y * g_ref[...].astype(jnp.float32)
                  + b_ref[...].astype(jnp.float32)).astype(o_ref.dtype)


def _ln_kernel(x_ref, g_ref, b_ref, o_ref, *, eps):
    x = x_ref[...].astype(jnp.float32)
    mean = jnp.mean(x, axis=-1, keepdims=True)
    xc = x - mean
    var = jnp.mean(xc * xc, axis=-1, keepdims=True)
    y = xc * lax.rsqrt(var + eps)
    o_ref[...] = (y * g_ref[...].astype(jnp.float32)
                  + b_ref[...].astype(jnp.float32)).astype(o_ref.dtype)


# ------------------------------ Pallas wrappers --------------------------------

def linear(x, w_t, b, activation=None, *, tm=256, tn=256, tk=512):
    """x: (M, K), w_t: (K, N) (already-transposed torch weight), b: (N,)."""
    M, K = x.shape
    N = w_t.shape[1]
    tm = _pick_tile(M, tm, 8)
    tn = _pick_tile(N, tn, 128)
    tk = _pick_tile(K, tk, 128)
    grid = (M // tm, N // tn, K // tk)
    return pl.pallas_call(
        functools.partial(_matmul_kernel, activation=activation),
        out_shape=jax.ShapeDtypeStruct((M, N), x.dtype),
        grid=grid,
        in_specs=[
            pl.BlockSpec((tm, tk), lambda i, j, k: (i, k)),
            pl.BlockSpec((tk, tn), lambda i, j, k: (k, j)),
            pl.BlockSpec((1, tn), lambda i, j, k: (0, j)),
        ],
        out_specs=pl.BlockSpec((tm, tn), lambda i, j, k: (i, j)),
        scratch_shapes=[pltpu.VMEM((tm, tn), jnp.float32)],
        compiler_params=pltpu.CompilerParams(
            dimension_semantics=("parallel", "parallel", "arbitrary")),
    )(x, w_t, b.reshape(1, N))


def attention_core(q, kv, num_heads, *, tq=256):
    """q: (B, Sq, E); kv: (B, Sk, 2E) with K in the first E cols, V in the last E."""
    # TODO(synk): for long sequences, add a KV grid axis with online-softmax (flash)
    # m/l/acc scratch so the full per-batch K/V block need not be VMEM-resident.
    B, Sq, E = q.shape
    Sk = kv.shape[1]
    Dh = E // num_heads
    tq = _pick_tile(Sq, tq, 8)
    grid = (B, Sq // tq)
    return pl.pallas_call(
        functools.partial(_attn_kernel, num_heads=num_heads,
                          scale=1.0 / (Dh ** 0.5)),
        out_shape=jax.ShapeDtypeStruct((B, Sq, E), q.dtype),
        grid=grid,
        in_specs=[
            pl.BlockSpec((1, tq, E), lambda b, i: (b, i, 0)),
            pl.BlockSpec((1, Sk, 2 * E), lambda b, i: (b, 0, 0)),  # KV resident per batch
        ],
        out_specs=pl.BlockSpec((1, tq, E), lambda b, i: (b, i, 0)),
        compiler_params=pltpu.CompilerParams(
            dimension_semantics=("parallel", "parallel")),
    )(q, kv)


def add_layernorm(x, res, gamma, beta, eps=1e-5, *, tm=256):
    """x, res: (M, E). Returns LayerNorm(x + res), tiled over rows."""
    M, E = x.shape
    tm = _pick_tile(M, tm, 8)
    return pl.pallas_call(
        functools.partial(_add_ln_kernel, eps=eps),
        out_shape=jax.ShapeDtypeStruct((M, E), x.dtype),
        grid=(M // tm,),
        in_specs=[
            pl.BlockSpec((tm, E), lambda i: (i, 0)),
            pl.BlockSpec((tm, E), lambda i: (i, 0)),
            pl.BlockSpec((1, E), lambda i: (0, 0)),
            pl.BlockSpec((1, E), lambda i: (0, 0)),
        ],
        out_specs=pl.BlockSpec((tm, E), lambda i: (i, 0)),
        compiler_params=pltpu.CompilerParams(dimension_semantics=("parallel",)),
    )(x, res, gamma.reshape(1, E), beta.reshape(1, E))


def layernorm(x, gamma, beta, eps=1e-5, *, tm=256):
    """Plain LayerNorm(x) over last dim, tiled over rows (no fake zero residual)."""
    M, E = x.shape
    tm = _pick_tile(M, tm, 8)
    return pl.pallas_call(
        functools.partial(_ln_kernel, eps=eps),
        out_shape=jax.ShapeDtypeStruct((M, E), x.dtype),
        grid=(M // tm,),
        in_specs=[
            pl.BlockSpec((tm, E), lambda i: (i, 0)),
            pl.BlockSpec((1, E), lambda i: (0, 0)),
            pl.BlockSpec((1, E), lambda i: (0, 0)),
        ],
        out_specs=pl.BlockSpec((tm, E), lambda i: (i, 0)),
        compiler_params=pltpu.CompilerParams(dimension_semantics=("parallel",)),
    )(x, gamma.reshape(1, E), beta.reshape(1, E))


# --------------------------- Transformer modules -------------------------------

def mha_self(x_slab, B, S, p, num_heads):
    """Self-attention on a (B*S, E) slab with fused QKV projection."""
    E = x_slab.shape[-1]
    qkv = linear(x_slab, p["in_proj_w"].T, p["in_proj_b"])   # (B*S, 3E), one matmul
    q = qkv[:, :E].reshape(B, S, E)
    kv = qkv[:, E:].reshape(B, S, 2 * E)
    o = attention_core(q, kv, num_heads).reshape(B * S, E)
    return linear(o, p["out_proj_w"].T, p["out_proj_b"])


def mha_cross(q_slab, mem_slab, B, Sq, Sk, p, num_heads):
    """Cross-attention: Q from q_slab (B*Sq, E), fused K/V from mem_slab (B*Sk, E)."""
    E = q_slab.shape[-1]
    wq, wk, wv = jnp.split(p["in_proj_w"], 3, axis=0)
    bq, bk, bv = jnp.split(p["in_proj_b"], 3)
    q = linear(q_slab, wq.T, bq).reshape(B, Sq, E)
    kv = linear(mem_slab, jnp.concatenate([wk, wv], axis=0).T,
                jnp.concatenate([bk, bv])).reshape(B, Sk, 2 * E)
    o = attention_core(q, kv, num_heads).reshape(B * Sq, E)
    return linear(o, p["out_proj_w"].T, p["out_proj_b"])


def encoder_layer(src, B, S, p, num_heads, eps=1e-5):
    attn = mha_self(src, B, S, p["self_attn"], num_heads)
    src = add_layernorm(src, attn, p["norm1_g"], p["norm1_b"], eps)
    ff = linear(src, p["lin1_w"].T, p["lin1_b"], activation="relu")
    ff = linear(ff, p["lin2_w"].T, p["lin2_b"])
    src = add_layernorm(src, ff, p["norm2_g"], p["norm2_b"], eps)
    return src


def decoder_layer(tgt, mem, B, S, Sm, p, num_heads, eps=1e-5):
    sa = mha_self(tgt, B, S, p["self_attn"], num_heads)
    tgt = add_layernorm(tgt, sa, p["norm1_g"], p["norm1_b"], eps)
    ca = mha_cross(tgt, mem, B, S, Sm, p["cross_attn"], num_heads)
    tgt = add_layernorm(tgt, ca, p["norm2_g"], p["norm2_b"], eps)
    ff = linear(tgt, p["lin1_w"].T, p["lin1_b"], activation="relu")
    ff = linear(ff, p["lin2_w"].T, p["lin2_b"])
    tgt = add_layernorm(tgt, ff, p["norm3_g"], p["norm3_b"], eps)
    return tgt


def llama_forward(params, x, num_heads):
    """x: (seq, batch) int32 token ids (PyTorch batch_first=False).
    Returns logits (seq, batch, vocab). No causal mask, matching nn.Transformer defaults."""
    S, B = x.shape
    # Embedding gather kept as XLA glue; go batch-major internally so each batch's
    # rows form a contiguous lane-dense (S, E) block that attention can tile directly.
    emb = jnp.take(params["embedding"], x.T, axis=0)          # (B, S, E)
    E = emb.shape[-1]
    slab = emb.reshape(B * S, E)

    mem = slab
    for lp in params["encoder_layers"]:
        mem = encoder_layer(mem, B, S, lp, num_heads)
    mem = layernorm(mem, params["enc_norm_g"], params["enc_norm_b"])

    out = slab
    for lp in params["decoder_layers"]:
        out = decoder_layer(out, mem, B, S, S, lp, num_heads)
    out = layernorm(out, params["dec_norm_g"], params["dec_norm_b"])

    V = params["fc_w"].shape[0]
    logits = linear(out, params["fc_w"].T, params["fc_b"])    # (B*S, V), tiled over vocab
    return jnp.transpose(logits.reshape(B, S, V), (1, 0, 2))  # back to (S, B, V)


# ------------------------------ Param init --------------------------------------

def _glorot(key, shape):
    fan_out, fan_in = shape[0], shape[-1]
    lim = (6.0 / (fan_in + fan_out)) ** 0.5
    return jax.random.uniform(key, shape, jnp.float32, -lim, lim)


def init_mha_params(key, E):
    k1, k2 = jax.random.split(key)
    return dict(
        in_proj_w=_glorot(k1, (3 * E, E)),
        in_proj_b=jnp.zeros((3 * E,), jnp.float32),
        out_proj_w=_glorot(k2, (E, E)),
        out_proj_b=jnp.zeros((E,), jnp.float32),
    )


def init_ffn_norm_params(key, E, H, n_norms):
    k1, k2 = jax.random.split(key)
    p = dict(
        lin1_w=_glorot(k1, (H, E)), lin1_b=jnp.zeros((H,), jnp.float32),
        lin2_w=_glorot(k2, (E, H)), lin2_b=jnp.zeros((E,), jnp.float32),
    )
    for i in range(1, n_norms + 1):
        p[f"norm{i}_g"] = jnp.ones((E,), jnp.float32)
        p[f"norm{i}_b"] = jnp.zeros((E,), jnp.float32)
    return p


def init_params(key, vocab_size, embed_size, hidden_size, num_layers, num_heads):
    keys = jax.random.split(key, 4 + 4 * num_layers)
    it = iter(keys)
    params = dict(
        embedding=0.02 * jax.random.normal(next(it), (vocab_size, embed_size), jnp.float32),
        fc_w=_glorot(next(it), (vocab_size, embed_size)),
        fc_b=jnp.zeros((vocab_size,), jnp.float32),
        enc_norm_g=jnp.ones((embed_size,), jnp.float32),
        enc_norm_b=jnp.zeros((embed_size,), jnp.float32),
        dec_norm_g=jnp.ones((embed_size,), jnp.float32),
        dec_norm_b=jnp.zeros((embed_size,), jnp.float32),
        encoder_layers=[],
        decoder_layers=[],
    )
    for _ in range(num_layers):
        lp = dict(self_attn=init_mha_params(next(it), embed_size))
        lp.update(init_ffn_norm_params(next(it), embed_size, hidden_size, n_norms=2))
        params["encoder_layers"].append(lp)
    for li in range(num_layers):
        lp = dict(
            self_attn=init_mha_params(next(it), embed_size),
            cross_attn=init_mha_params(next(it), embed_size),
        )
        lp.update(init_ffn_norm_params(jax.random.fold_in(key, li + 100),
                                       embed_size, hidden_size, n_norms=3))
        params["decoder_layers"].append(lp)
    return params


# --------------------------------- Main ------------------------------------------

if __name__ == "__main__":
    vocab_size, embed_size, hidden_size = 100, 32, 64
    num_layers, num_heads, dropout = 2, 4, 0.0
    seq_len, batch = 8, 2

    root = jax.random.PRNGKey(0)
    k_param, k_tok = jax.random.split(root)
    params = init_params(k_param, vocab_size, embed_size, hidden_size, num_layers, num_heads)

    x = jax.random.randint(k_tok, (seq_len, batch), 0, vocab_size, dtype=jnp.int32)

    fwd = jax.jit(functools.partial(llama_forward, num_heads=num_heads))
    logits = fwd(params, x)
    jax.block_until_ready(logits)

    assert logits.shape == (seq_len, batch, vocab_size)
    assert bool(jnp.all(jnp.isfinite(logits)))
    print("KERNEL_OK")
</pallas_src>

<mosaic_0001>
module attributes {stable_mosaic.version = 11 : i64} {
  func.func @_matmul_kernel(%arg0: i32, %arg1: i32, %arg2: i32, %arg3: memref<16x32xf32, #tpu.memory_space<vmem>>, %arg4: memref<32x96xf32, #tpu.memory_space<vmem>>, %arg5: memref<1x96xf32, #tpu.memory_space<vmem>>, %arg6: memref<16x96xf32, #tpu.memory_space<vmem>>, %arg7: memref<16x96xf32, #tpu.memory_space<vmem>>) attributes {dimension_semantics = [#tpu.dimension_semantics<parallel>, #tpu.dimension_semantics<parallel>, #tpu.dimension_semantics<arbitrary>], iteration_bounds = array<i64: 1, 1, 1>, scalar_prefetch = 0 : i64, scratch_operands = 1 : i64, tpu.core_type = #tpu.core_type<tc>, window_params = [{transform_indices = @transform_0, window_bounds = array<i64: 16, 32>}, {transform_indices = @transform_1, window_bounds = array<i64: 32, 96>}, {transform_indices = @transform_2, window_bounds = array<i64: 1, 96>}, {transform_indices = @transform_3, window_bounds = array<i64: 16, 96>}]} {
    %c0_i32 = arith.constant 0 : i32
    %0 = arith.cmpi eq, %arg2, %c0_i32 : i32
    %1 = arith.extui %0 : i1 to i32
    %c0_i32_0 = arith.constant 0 : i32
    %2 = arith.cmpi ne, %1, %c0_i32_0 : i32
    scf.if %2 {
      %cst_10 = arith.constant 0.000000e+00 : f32
      %12 = vector.broadcast %cst_10 : f32 to vector<16x96xf32>
      %c0_11 = arith.constant 0 : index
      %c0_12 = arith.constant 0 : index
      %13 = vector.load %arg7[%c0_11, %c0_12] : memref<16x96xf32, #tpu.memory_space<vmem>>, vector<16x96xf32>
      tpu.vector_store %arg7[%c0_11, %c0_12], %12 {strides = array<i32>} : memref<16x96xf32, #tpu.memory_space<vmem>>, vector<16x96xf32>,
    } else {
    }
    %c0 = arith.constant 0 : index
    %c0_1 = arith.constant 0 : index
    %3 = vector.load %arg7[%c0, %c0_1] : memref<16x96xf32, #tpu.memory_space<vmem>>, vector<16x96xf32>
    %c0_2 = arith.constant 0 : index
    %c0_3 = arith.constant 0 : index
    %4 = vector.load %arg3[%c0_2, %c0_3] : memref<16x32xf32, #tpu.memory_space<vmem>>, vector<16x32xf32>
    %c0_4 = arith.constant 0 : index
    %c0_5 = arith.constant 0 : index
    %5 = vector.load %arg4[%c0_4, %c0_5] : memref<32x96xf32, #tpu.memory_space<vmem>>, vector<32x96xf32>
    %cst = arith.constant dense<0.000000e+00> : vector<16x96xf32>
    %6 = tpu.matmul %4, %5, %cst {dimension_numbers = #tpu.dot_dimension_numbers<[1], [0], [0], [1], [0, 0, 1, 1], [], []>} : vector<16x32xf32>, vector<32x96xf32>, vector<16x96xf32> -> vector<16x96xf32>
    %7 = arith.addf %3, %6 : vector<16x96xf32>
    %c0_6 = arith.constant 0 : index
    %c0_7 = arith.constant 0 : index
    %8 = vector.load %arg7[%c0_6, %c0_7] : memref<16x96xf32, #tpu.memory_space<vmem>>, vector<16x96xf32>
    tpu.vector_store %arg7[%c0_6, %c0_7], %7 {strides = array<i32>} : memref<16x96xf32, #tpu.memory_space<vmem>>, vector<16x96xf32>,
    %c0_i32_8 = arith.constant 0 : i32
    %9 = arith.cmpi eq, %arg2, %c0_i32_8 : i32
    %10 = arith.extui %9 : i1 to i32
    %c0_i32_9 = arith.constant 0 : i32
    %11 = arith.cmpi ne, %10, %c0_i32_9 : i32
    scf.if %11 {
      %c0_10 = arith.constant 0 : index
      %c0_11 = arith.constant 0 : index
      %12 = vector.load %arg7[%c0_10, %c0_11] : memref<16x96xf32, #tpu.memory_space<vmem>>, vector<16x96xf32>
      %c0_12 = arith.constant 0 : index
      %c0_13 = arith.constant 0 : index
      %13 = vector.load %arg5[%c0_12, %c0_13] : memref<1x96xf32, #tpu.memory_space<vmem>>, vector<1x96xf32>
      %14 = vector.broadcast %13 : vector<1x96xf32> to vector<16x96xf32>
      %15 = arith.addf %12, %14 : vector<16x96xf32>
      %c0_14 = arith.constant 0 : index
      %c0_15 = arith.constant 0 : index
      %16 = vector.load %arg6[%c0_14, %c0_15] : memref<16x96xf32, #tpu.memory_space<vmem>>, vector<16x96xf32>
      tpu.vector_store %arg6[%c0_14, %c0_15], %15 {strides = array<i32>} : memref<16x96xf32, #tpu.memory_space<vmem>>, vector<16x96xf32>,
    } else {
    }
    return
  }
  func.func @transform_0(%arg0: i32, %arg1: i32, %arg2: i32) -> (i32, i32) {
    %c0_i32 = arith.constant 0 : i32
    return %arg0, %arg2 : i32, i32
  }
  func.func @transform_1(%arg0: i32, %arg1: i32, %arg2: i32) -> (i32, i32) {
    %c0_i32 = arith.constant 0 : i32
    return %arg2, %arg1 : i32, i32
  }
  func.func @transform_2(%arg0: i32, %arg1: i32, %arg2: i32) -> (i32, i32) {
    %c0_i32 = arith.constant 0 : i32
    %c0_i32_0 = arith.constant 0 : i32
    return %c0_i32, %arg1 : i32, i32
  }
  func.func @transform_3(%arg0: i32, %arg1: i32, %arg2: i32) -> (i32, i32) {
    %c0_i32 = arith.constant 0 : i32
    return %arg0, %arg1 : i32, i32
  }
}

module attributes {stable_mosaic.version = 11 : i64} {
  func.func @_attn_kernel(%arg0: i32, %arg1: i32, %arg2: memref<1x8x32xf32, #tpu.memory_space<vmem>>, %arg3: memref<1x8x64xf32, #tpu.memory_space<vmem>>, %arg4: memref<1x8x32xf32, #tpu.memory_space<vmem>>) attributes {dimension_semantics = [#tpu.dimension_semantics<parallel>, #tpu.dimension_semantics<parallel>], iteration_bounds = array<i64: 2, 1>, scalar_prefetch = 0 : i64, scratch_operands = 0 : i64, tpu.core_type = #tpu.core_type<tc>, window_params = [{transform_indices = @transform_0, window_bounds = array<i64: 1, 8, 32>}, {transform_indices = @transform_1, window_bounds = array<i64: 1, 8, 64>}, {transform_indices = @transform_2, window_bounds = array<i64: 1, 8, 32>}]} {
    %c0 = arith.constant 0 : index
    %c0_0 = arith.constant 0 : index
    %c0_1 = arith.constant 0 : index
    %0 = vector.load %arg2[%c0, %c0_0, %c0_1] : memref<1x8x32xf32, #tpu.memory_space<vmem>>, vector<1x8x32xf32>
    %1 = vector.shape_cast %0 : vector<1x8x32xf32> to vector<8x32xf32>
    %cst = arith.constant 0.353553385 : f32
    %2 = vector.broadcast %cst : f32 to vector<8x32xf32>
    %3 = arith.mulf %1, %2 : vector<8x32xf32>
    %c0_2 = arith.constant 0 : index
    %c0_3 = arith.constant 0 : index
    %c0_4 = arith.constant 0 : index
    %4 = vector.load %arg3[%c0_2, %c0_3, %c0_4] : memref<1x8x64xf32, #tpu.memory_space<vmem>>, vector<1x8x64xf32>
    %5 = vector.shape_cast %4 : vector<1x8x64xf32> to vector<8x64xf32>
    %6 = vector.extract_strided_slice %3 {offsets = [0, 0], sizes = [8, 8], strides = [1, 1]} : vector<8x32xf32> to vector<8x8xf32>
    %7 = vector.extract_strided_slice %5 {offsets = [0, 0], sizes = [8, 8], strides = [1, 1]} : vector<8x64xf32> to vector<8x8xf32>
    %8 = vector.extract_strided_slice %5 {offsets = [0, 32], sizes = [8, 8], strides = [1, 1]} : vector<8x64xf32> to vector<8x8xf32>
    %cst_5 = arith.constant dense<0.000000e+00> : vector<8x8xf32>
    %9 = tpu.matmul %6, %7, %cst_5 {dimension_numbers = #tpu.dot_dimension_numbers<[1], [1], [0], [0], [0, 0, 1, 0], [], []>} : vector<8x8xf32>, vector<8x8xf32>, vector<8x8xf32> -> vector<8x8xf32>
    %cst_6 = arith.constant dense<0xFF800000> : vector<8xf32>
    %10 = vector.multi_reduction <maximumf>, %9, %cst_6 [1] : vector<8x8xf32> to vector<8xf32>
    %11 = vector.shape_cast %10 : vector<8xf32> to vector<8x1xf32>
    %12 = vector.broadcast %11 : vector<8x1xf32> to vector<8x8xf32>
    %13 = arith.subf %9, %12 : vector<8x8xf32>
    %14 = math.exp %13 : vector<8x8xf32>
    %cst_7 = arith.constant dense<0.000000e+00> : vector<8xf32>
    %15 = vector.multi_reduction <add>, %14, %cst_7 [1] : vector<8x8xf32> to vector<8xf32>
    %16 = vector.shape_cast %15 : vector<8xf32> to vector<8x1xf32>
    %cst_8 = arith.constant dense<0.000000e+00> : vector<8x8xf32>
    %17 = tpu.matmul %14, %8, %cst_8 {dimension_numbers = #tpu.dot_dimension_numbers<[1], [0], [0], [1], [0, 0, 1, 1], [], []>} : vector<8x8xf32>, vector<8x8xf32>, vector<8x8xf32> -> vector<8x8xf32>
    %18 = tpu.reciprocal %16 {approx = true} : vector<8x1xf32> -> vector<8x1xf32>
    %19 = vector.broadcast %18 : vector<8x1xf32> to vector<8x8xf32>
    %20 = arith.mulf %17, %19 : vector<8x8xf32>
    %21 = vector.extract_strided_slice %3 {offsets = [0, 8], sizes = [8, 8], strides = [1, 1]} : vector<8x32xf32> to vector<8x8xf32>
    %22 = vector.extract_strided_slice %5 {offsets = [0, 8], sizes = [8, 8], strides = [1, 1]} : vector<8x64xf32> to vector<8x8xf32>
    %23 = vector.extract_strided_slice %5 {offsets = [0, 40], sizes = [8, 8], strides = [1, 1]} : vector<8x64xf32> to vector<8x8xf32>
    %cst_9 = arith.constant dense<0.000000e+00> : vector<8x8xf32>
    %24 = tpu.matmul %21, %22, %cst_9 {dimension_numbers = #tpu.dot_dimension_numbers<[1], [1], [0], [0], [0, 0, 1, 0], [], []>} : vector<8x8xf32>, vector<8x8xf32>, vector<8x8xf32> -> vector<8x8xf32>
    %cst_10 = arith.constant dense<0xFF800000> : vector<8xf32>
    %25 = vector.multi_reduction <maximumf>, %24, %cst_10 [1] : vector<8x8xf32> to vector<8xf32>
    %26 = vector.shape_cast %25 : vector<8xf32> to vector<8x1xf32>
    %27 = vector.broadcast %26 : vector<8x1xf32> to vector<8x8xf32>
    %28 = arith.subf %24, %27 : vector<8x8xf32>
    %29 = math.exp %28 : vector<8x8xf32>
    %cst_11 = arith.constant dense<0.000000e+00> : vector<8xf32>
    %30 = vector.multi_reduction <add>, %29, %cst_11 [1] : vector<8x8xf32> to vector<8xf32>
    %31 = vector.shape_cast %30 : vector<8xf32> to vector<8x1xf32>
    %cst_12 = arith.constant dense<0.000000e+00> : vector<8x8xf32>
    %32 = tpu.matmul %29, %23, %cst_12 {dimension_numbers = #tpu.dot_dimension_numbers<[1], [0], [0], [1], [0, 0, 1, 1], [], []>} : vector<8x8xf32>, vector<8x8xf32>, vector<8x8xf32> -> vector<8x8xf32>
    %33 = tpu.reciprocal %31 {approx = true} : vector<8x1xf32> -> vector<8x1xf32>
    %34 = vector.broadcast %33 : vector<8x1xf32> to vector<8x8xf32>
    %35 = arith.mulf %32, %34 : vector<8x8xf32>
    %36 = vector.extract_strided_slice %3 {offsets = [0, 16], sizes = [8, 8], strides = [1, 1]} : vector<8x32xf32> to vector<8x8xf32>
    %37 = vector.extract_strided_slice %5 {offsets = [0, 16], sizes = [8, 8], strides = [1, 1]} : vector<8x64xf32> to vector<8x8xf32>
    %38 = vector.extract_strided_slice %5 {offsets = [0, 48], sizes = [8, 8], strides = [1, 1]} : vector<8x64xf32> to vector<8x8xf32>
    %cst_13 = arith.constant dense<0.000000e+00> : vector<8x8xf32>
    %39 = tpu.matmul %36, %37, %cst_13 {dimension_numbers = #tpu.dot_dimension_numbers<[1], [1], [0], [0], [0, 0, 1, 0], [], []>} : vector<8x8xf32>, vector<8x8xf32>, vector<8x8xf32> -> vector<8x8xf32>
    %cst_14 = arith.constant dense<0xFF800000> : vector<8xf32>
    %40 = vector.multi_reduction <maximumf>, %39, %cst_14 [1] : vector<8x8xf32> to vector<8xf32>
    %41 = vector.shape_cast %40 : vector<8xf32> to vector<8x1xf32>
    %42 = vector.broadcast %41 : vector<8x1xf32> to vector<8x8xf32>
    %43 = arith.subf %39, %42 : vector<8x8xf32>
    %44 = math.exp %43 : vector<8x8xf32>
    %cst_15 = arith.constant dense<0.000000e+00> : vector<8xf32>
    %45 = vector.multi_reduction <add>, %44, %cst_15 [1] : vector<8x8xf32> to vector<8xf32>
    %46 = vector.shape_cast %45 : vector<8xf32> to vector<8x1xf32>
    %cst_16 = arith.constant dense<0.000000e+00> : vector<8x8xf32>
    %47 = tpu.matmul %44, %38, %cst_16 {dimension_numbers = #tpu.dot_dimension_numbers<[1], [0], [0], [1], [0, 0, 1, 1], [], []>} : vector<8x8xf32>, vector<8x8xf32>, vector<8x8xf32> -> vector<8x8xf32>
    %48 = tpu.reciprocal %46 {approx = true} : vector<8x1xf32> -> vector<8x1xf32>
    %49 = vector.broadcast %48 : vector<8x1xf32> to vector<8x8xf32>
    %50 = arith.mulf %47, %49 : vector<8x8xf32>
    %51 = vector.extract_strided_slice %3 {offsets = [0, 24], sizes = [8, 8], strides = [1, 1]} : vector<8x32xf32> to vector<8x8xf32>
    %52 = vector.extract_strided_slice %5 {offsets = [0, 24], sizes = [8, 8], strides = [1, 1]} : vector<8x64xf32> to vector<8x8xf32>
    %53 = vector.extract_strided_slice %5 {offsets = [0, 56], sizes = [8, 8], strides = [1, 1]} : vector<8x64xf32> to vector<8x8xf32>
    %cst_17 = arith.constant dense<0.000000e+00> : vector<8x8xf32>
    %54 = tpu.matmul %51, %52, %cst_17 {dimension_numbers = #tpu.dot_dimension_numbers<[1], [1], [0], [0], [0, 0, 1, 0], [], []>} : vector<8x8xf32>, vector<8x8xf32>, vector<8x8xf32> -> vector<8x8xf32>
    %cst_18 = arith.constant dense<0xFF800000> : vector<8xf32>
    %55 = vector.multi_reduction <maximumf>, %54, %cst_18 [1] : vector<8x8xf32> to vector<8xf32>
    %56 = vector.shape_cast %55 : vector<8xf32> to vector<8x1xf32>
    %57 = vector.broadcast %56 : vector<8x1xf32> to vector<8x8xf32>
    %58 = arith.subf %54, %57 : vector<8x8xf32>
    %59 = math.exp %58 : vector<8x8xf32>
    %cst_19 = arith.constant dense<0.000000e+00> : vector<8xf32>
    %60 = vector.multi_reduction <add>, %59, %cst_19 [1] : vector<8x8xf32> to vector<8xf32>
    %61 = vector.shape_cast %60 : vector<8xf32> to vector<8x1xf32>
    %cst_20 = arith.constant dense<0.000000e+00> : vector<8x8xf32>
    %62 = tpu.matmul %59, %53, %cst_20 {dimension_numbers = #tpu.dot_dimension_numbers<[1], [0], [0], [1], [0, 0, 1, 1], [], []>} : vector<8x8xf32>, vector<8x8xf32>, vector<8x8xf32> -> vector<8x8xf32>
    %63 = tpu.reciprocal %61 {approx = true} : vector<8x1xf32> -> vector<8x1xf32>
    %64 = vector.broadcast %63 : vector<8x1xf32> to vector<8x8xf32>
    %65 = arith.mulf %62, %64 : vector<8x8xf32>
    %66 = tpu.concatenate %20, %35, %50, %65 in 1 : vector<8x8xf32>, vector<8x8xf32>, vector<8x8xf32>, vector<8x8xf32> -> vector<8x32xf32>
    %c0_21 = arith.constant 0 : index
    %c0_22 = arith.constant 0 : index
    %c0_23 = arith.constant 0 : index
    %67 = vector.load %arg4[%c0_21, %c0_22, %c0_23] : memref<1x8x32xf32, #tpu.memory_space<vmem>>, vector<1x8x32xf32>
    %68 = vector.shape_cast %67 : vector<1x8x32xf32> to vector<8x32xf32>
    %69 = vector.shape_cast %66 : vector<8x32xf32> to vector<1x8x32xf32>
    tpu.vector_store %arg4[%c0_21, %c0_22, %c0_23], %69 {strides = array<i32>} : memref<1x8x32xf32, #tpu.memory_space<vmem>>, vector<1x8x32xf32>,
    return
  }
  func.func @transform_0(%arg0: i32, %arg1: i32) -> (i32, i32, i32) {
    %c0_i32 = arith.constant 0 : i32
    %c0_i32_0 = arith.constant 0 : i32
    return %arg0, %arg1, %c0_i32 : i32, i32, i32
  }
  func.func @transform_1(%arg0: i32, %arg1: i32) -> (i32, i32, i32) {
    %c0_i32 = arith.constant 0 : i32
    %c0_i32_0 = arith.constant 0 : i32
    %c0_i32_1 = arith.constant 0 : i32
    return %arg0, %c0_i32, %c0_i32_0 : i32, i32, i32
  }
  func.func @transform_2(%arg0: i32, %arg1: i32) -> (i32, i32, i32) {
    %c0_i32 = arith.constant 0 : i32
    %c0_i32_0 = arith.constant 0 : i32
    return %arg0, %arg1, %c0_i32 : i32, i32, i32
  }
}

module attributes {stable_mosaic.version = 11 : i64} {
  func.func @_matmul_kernel(%arg0: i32, %arg1: i32, %arg2: i32, %arg3: memref<16x32xf32, #tpu.memory_space<vmem>>, %arg4: memref<32x32xf32, #tpu.memory_space<vmem>>, %arg5: memref<1x32xf32, #tpu.memory_space<vmem>>, %arg6: memref<16x32xf32, #tpu.memory_space<vmem>>, %arg7: memref<16x32xf32, #tpu.memory_space<vmem>>) attributes {dimension_semantics = [#tpu.dimension_semantics<parallel>, #tpu.dimension_semantics<parallel>, #tpu.dimension_semantics<arbitrary>], iteration_bounds = array<i64: 1, 1, 1>, scalar_prefetch = 0 : i64, scratch_operands = 1 : i64, tpu.core_type = #tpu.core_type<tc>, window_params = [{transform_indices = @transform_0, window_bounds = array<i64: 16, 32>}, {transform_indices = @transform_1, window_bounds = array<i64: 32, 32>}, {transform_indices = @transform_2, window_bounds = array<i64: 1, 32>}, {transform_indices = @transform_3, window_bounds = array<i64: 16, 32>}]} {
    %c0_i32 = arith.constant 0 : i32
    %0 = arith.cmpi eq, %arg2, %c0_i32 : i32
    %1 = arith.extui %0 : i1 to i32
    %c0_i32_0 = arith.constant 0 : i32
    %2 = arith.cmpi ne, %1, %c0_i32_0 : i32
    scf.if %2 {
      %cst_10 = arith.constant 0.000000e+00 : f32
      %12 = vector.broadcast %cst_10 : f32 to vector<16x32xf32>
      %c0_11 = arith.constant 0 : index
      %c0_12 = arith.constant 0 : index
      %13 = vector.load %arg7[%c0_11, %c0_12] : memref<16x32xf32, #tpu.memory_space<vmem>>, vector<16x32xf32>
      tpu.vector_store %arg7[%c0_11, %c0_12], %12 {strides = array<i32>} : memref<16x32xf32, #tpu.memory_space<vmem>>, vector<16x32xf32>,
    } else {
    }
    %c0 = arith.constant 0 : index
    %c0_1 = arith.constant 0 : index
    %3 = vector.load %arg7[%c0, %c0_1] : memref<16x32xf32, #tpu.memory_space<vmem>>, vector<16x32xf32>
    %c0_2 = arith.constant 0 : index
    %c0_3 = arith.constant 0 : index
    %4 = vector.load %arg3[%c0_2, %c0_3] : memref<16x32xf32, #tpu.memory_space<vmem>>, vector<16x32xf32>
    %c0_4 = arith.constant 0 : index
    %c0_5 = arith.constant 0 : index
    %5 = vector.load %arg4[%c0_4, %c0_5] : memref<32x32xf32, #tpu.memory_space<vmem>>, vector<32x32xf32>
    %cst = arith.constant dense<0.000000e+00> : vector<16x32xf32>
    %6 = tpu.matmul %4, %5, %cst {dimension_numbers = #tpu.dot_dimension_numbers<[1], [0], [0], [1], [0, 0, 1, 1], [], []>} : vector<16x32xf32>, vector<32x32xf32>, vector<16x32xf32> -> vector<16x32xf32>
    %7 = arith.addf %3, %6 : vector<16x32xf32>
    %c0_6 = arith.constant 0 : index
    %c0_7 = arith.constant 0 : index
    %8 = vector.load %arg7[%c0_6, %c0_7] : memref<16x32xf32, #tpu.memory_space<vmem>>, vector<16x32xf32>
    tpu.vector_store %arg7[%c0_6, %c0_7], %7 {strides = array<i32>} : memref<16x32xf32, #tpu.memory_space<vmem>>, vector<16x32xf32>,
    %c0_i32_8 = arith.constant 0 : i32
    %9 = arith.cmpi eq, %arg2, %c0_i32_8 : i32
    %10 = arith.extui %9 : i1 to i32
    %c0_i32_9 = arith.constant 0 : i32
    %11 = arith.cmpi ne, %10, %c0_i32_9 : i32
    scf.if %11 {
      %c0_10 = arith.constant 0 : index
      %c0_11 = arith.constant 0 : index
      %12 = vector.load %arg7[%c0_10, %c0_11] : memref<16x32xf32, #tpu.memory_space<vmem>>, vector<16x32xf32>
      %c0_12 = arith.constant 0 : index
      %c0_13 = arith.constant 0 : index
      %13 = vector.load %arg5[%c0_12, %c0_13] : memref<1x32xf32, #tpu.memory_space<vmem>>, vector<1x32xf32>
      %14 = vector.broadcast %13 : vector<1x32xf32> to vector<16x32xf32>
      %15 = arith.addf %12, %14 : vector<16x32xf32>
      %c0_14 = arith.constant 0 : index
      %c0_15 = arith.constant 0 : index
      %16 = vector.load %arg6[%c0_14, %c0_15] : memref<16x32xf32, #tpu.memory_space<vmem>>, vector<16x32xf32>
      tpu.vector_store %arg6[%c0_14, %c0_15], %15 {strides = array<i32>} : memref<16x32xf32, #tpu.memory_space<vmem>>, vector<16x32xf32>,
    } else {
    }
    return
  }
  func.func @transform_0(%arg0: i32, %arg1: i32, %arg2: i32) -> (i32, i32) {
    %c0_i32 = arith.constant 0 : i32
    return %arg0, %arg2 : i32, i32
  }
  func.func @transform_1(%arg0: i32, %arg1: i32, %arg2: i32) -> (i32, i32) {
    %c0_i32 = arith.constant 0 : i32
    return %arg2, %arg1 : i32, i32
  }
  func.func @transform_2(%arg0: i32, %arg1: i32, %arg2: i32) -> (i32, i32) {
    %c0_i32 = arith.constant 0 : i32
    %c0_i32_0 = arith.constant 0 : i32
    return %c0_i32, %arg1 : i32, i32
  }
  func.func @transform_3(%arg0: i32, %arg1: i32, %arg2: i32) -> (i32, i32) {
    %c0_i32 = arith.constant 0 : i32
    return %arg0, %arg1 : i32, i32
  }
}

module attributes {stable_mosaic.version = 11 : i64} {
  func.func @_add_ln_kernel(%arg0: i32, %arg1: memref<16x32xf32, #tpu.memory_space<vmem>>, %arg2: memref<16x32xf32, #tpu.memory_space<vmem>>, %arg3: memref<1x32xf32, #tpu.memory_space<vmem>>, %arg4: memref<1x32xf32, #tpu.memory_space<vmem>>, %arg5: memref<16x32xf32, #tpu.memory_space<vmem>>) attributes {dimension_semantics = [#tpu.dimension_semantics<parallel>], iteration_bounds = array<i64: 1>, scalar_prefetch = 0 : i64, scratch_operands = 0 : i64, tpu.core_type = #tpu.core_type<tc>, window_params = [{transform_indices = @transform_0, window_bounds = array<i64: 16, 32>}, {transform_indices = @transform_1, window_bounds = array<i64: 16, 32>}, {pipeline_mode = #tpu.pipeline_mode<synchronous>, transform_indices = @transform_2, window_bounds = array<i64: 1, 32>}, {pipeline_mode = #tpu.pipeline_mode<synchronous>, transform_indices = @transform_3, window_bounds = array<i64: 1, 32>}, {transform_indices = @transform_4, window_bounds = array<i64: 16, 32>}]} {
    %c0 = arith.constant 0 : index
    %c0_0 = arith.constant 0 : index
    %0 = vector.load %arg1[%c0, %c0_0] : memref<16x32xf32, #tpu.memory_space<vmem>>, vector<16x32xf32>
    %c0_1 = arith.constant 0 : index
    %c0_2 = arith.constant 0 : index
    %1 = vector.load %arg2[%c0_1, %c0_2] : memref<16x32xf32, #tpu.memory_space<vmem>>, vector<16x32xf32>
    %2 = arith.addf %0, %1 : vector<16x32xf32>
    %cst = arith.constant dense<0.000000e+00> : vector<16xf32>
    %3 = vector.multi_reduction <add>, %2, %cst [1] : vector<16x32xf32> to vector<16xf32>
    %4 = vector.shape_cast %3 : vector<16xf32> to vector<16x1xf32>
    %cst_3 = arith.constant 3.200000e+01 : f32
    %5 = vector.broadcast %cst_3 : f32 to vector<16x1xf32>
    %6 = arith.divf %4, %5 : vector<16x1xf32>
    %7 = vector.broadcast %6 : vector<16x1xf32> to vector<16x32xf32>
    %8 = arith.subf %2, %7 : vector<16x32xf32>
    %9 = arith.mulf %8, %8 : vector<16x32xf32>
    %cst_4 = arith.constant dense<0.000000e+00> : vector<16xf32>
    %10 = vector.multi_reduction <add>, %9, %cst_4 [1] : vector<16x32xf32> to vector<16xf32>
    %11 = vector.shape_cast %10 : vector<16xf32> to vector<16x1xf32>
    %cst_5 = arith.constant 3.200000e+01 : f32
    %12 = vector.broadcast %cst_5 : f32 to vector<16x1xf32>
    %13 = arith.divf %11, %12 : vector<16x1xf32>
    %cst_6 = arith.constant 9.99999974E-6 : f32
    %14 = vector.broadcast %cst_6 : f32 to vector<16x1xf32>
    %15 = arith.addf %13, %14 : vector<16x1xf32>
    %16 = math.rsqrt %15 : vector<16x1xf32>
    %17 = vector.broadcast %16 : vector<16x1xf32> to vector<16x32xf32>
    %18 = arith.mulf %8, %17 : vector<16x32xf32>
    %c0_7 = arith.constant 0 : index
    %c0_8 = arith.constant 0 : index
    %19 = vector.load %arg3[%c0_7, %c0_8] : memref<1x32xf32, #tpu.memory_space<vmem>>, vector<1x32xf32>
    %20 = vector.broadcast %19 : vector<1x32xf32> to vector<16x32xf32>
    %21 = arith.mulf %18, %20 : vector<16x32xf32>
    %c0_9 = arith.constant 0 : index
    %c0_10 = arith.constant 0 : index
    %22 = vector.load %arg4[%c0_9, %c0_10] : memref<1x32xf32, #tpu.memory_space<vmem>>, vector<1x32xf32>
    %23 = vector.broadcast %22 : vector<1x32xf32> to vector<16x32xf32>
    %24 = arith.addf %21, %23 : vector<16x32xf32>
    %c0_11 = arith.constant 0 : index
    %c0_12 = arith.constant 0 : index
    %25 = vector.load %arg5[%c0_11, %c0_12] : memref<16x32xf32, #tpu.memory_space<vmem>>, vector<16x32xf32>
    tpu.vector_store %arg5[%c0_11, %c0_12], %24 {strides = array<i32>} : memref<16x32xf32, #tpu.memory_space<vmem>>, vector<16x32xf32>,
    return
  }
  func.func @transform_0(%arg0: i32) -> (i32, i32) {
    %c0_i32 = arith.constant 0 : i32
    %c0_i32_0 = arith.constant 0 : i32
    return %arg0, %c0_i32 : i32, i32
  }
  func.func @transform_1(%arg0: i32) -> (i32, i32) {
    %c0_i32 = arith.constant 0 : i32
    %c0_i32_0 = arith.constant 0 : i32
    return %arg0, %c0_i32 : i32, i32
  }
  func.func @transform_2(%arg0: i32) -> (i32, i32) {
    %c0_i32 = arith.constant 0 : i32
    %c0_i32_0 = arith.constant 0 : i32
    %c0_i32_1 = arith.constant 0 : i32
    return %c0_i32, %c0_i32_0 : i32, i32
  }
  func.func @transform_3(%arg0: i32) -> (i32, i32) {
    %c0_i32 = arith.constant 0 : i32
    %c0_i32_0 = arith.constant 0 : i32
    %c0_i32_1 = arith.constant 0 : i32
    return %c0_i32, %c0_i32_0 : i32, i32
  }
  func.func @transform_4(%arg0: i32) -> (i32, i32) {
    %c0_i32 = arith.constant 0 : i32
    %c0_i32_0 = arith.constant 0 : i32
    return %arg0, %c0_i32 : i32, i32
  }
}

module attributes {stable_mosaic.version = 11 : i64} {
  func.func @_matmul_kernel(%arg0: i32, %arg1: i32, %arg2: i32, %arg3: memref<16x64xf32, #tpu.memory_space<vmem>>, %arg4: memref<64x32xf32, #tpu.memory_space<vmem>>, %arg5: memref<1x32xf32, #tpu.memory_space<vmem>>, %arg6: memref<16x32xf32, #tpu.memory_space<vmem>>, %arg7: memref<16x32xf32, #tpu.memory_space<vmem>>) attributes {dimension_semantics = [#tpu.dimension_semantics<parallel>, #tpu.dimension_semantics<parallel>, #tpu.dimension_semantics<arbitrary>], iteration_bounds = array<i64: 1, 1, 1>, scalar_prefetch = 0 : i64, scratch_operands = 1 : i64, tpu.core_type = #tpu.core_type<tc>, window_params = [{transform_indices = @transform_0, window_bounds = array<i64: 16, 64>}, {transform_indices = @transform_1, window_bounds = array<i64: 64, 32>}, {transform_indices = @transform_2, window_bounds = array<i64: 1, 32>}, {transform_indices = @transform_3, window_bounds = array<i64: 16, 32>}]} {
    %c0_i32 = arith.constant 0 : i32
    %0 = arith.cmpi eq, %arg2, %c0_i32 : i32
    %1 = arith.extui %0 : i1 to i32
    %c0_i32_0 = arith.constant 0 : i32
    %2 = arith.cmpi ne, %1, %c0_i32_0 : i32
    scf.if %2 {
      %cst_10 = arith.constant 0.000000e+00 : f32
      %12 = vector.broadcast %cst_10 : f32 to vector<16x32xf32>
      %c0_11 = arith.constant 0 : index
      %c0_12 = arith.constant 0 : index
      %13 = vector.load %arg7[%c0_11, %c0_12] : memref<16x32xf32, #tpu.memory_space<vmem>>, vector<16x32xf32>
      tpu.vector_store %arg7[%c0_11, %c0_12], %12 {strides = array<i32>} : memref<16x32xf32, #tpu.memory_space<vmem>>, vector<16x32xf32>,
    } else {
    }
    %c0 = arith.constant 0 : index
    %c0_1 = arith.constant 0 : index
    %3 = vector.load %arg7[%c0, %c0_1] : memref<16x32xf32, #tpu.memory_space<vmem>>, vector<16x32xf32>
    %c0_2 = arith.constant 0 : index
    %c0_3 = arith.constant 0 : index
    %4 = vector.load %arg3[%c0_2, %c0_3] : memref<16x64xf32, #tpu.memory_space<vmem>>, vector<16x64xf32>
    %c0_4 = arith.constant 0 : index
    %c0_5 = arith.constant 0 : index
    %5 = vector.load %arg4[%c0_4, %c0_5] : memref<64x32xf32, #tpu.memory_space<vmem>>, vector<64x32xf32>
    %cst = arith.constant dense<0.000000e+00> : vector<16x32xf32>
    %6 = tpu.matmul %4, %5, %cst {dimension_numbers = #tpu.dot_dimension_numbers<[1], [0], [0], [1], [0, 0, 1, 1], [], []>} : vector<16x64xf32>, vector<64x32xf32>, vector<16x32xf32> -> vector<16x32xf32>
    %7 = arith.addf %3, %6 : vector<16x32xf32>
    %c0_6 = arith.constant 0 : index
    %c0_7 = arith.constant 0 : index
    %8 = vector.load %arg7[%c0_6, %c0_7] : memref<16x32xf32, #tpu.memory_space<vmem>>, vector<16x32xf32>
    tpu.vector_store %arg7[%c0_6, %c0_7], %7 {strides = array<i32>} : memref<16x32xf32, #tpu.memory_space<vmem>>, vector<16x32xf32>,
    %c0_i32_8 = arith.constant 0 : i32
    %9 = arith.cmpi eq, %arg2, %c0_i32_8 : i32
    %10 = arith.extui %9 : i1 to i32
    %c0_i32_9 = arith.constant 0 : i32
    %11 = arith.cmpi ne, %10, %c0_i32_9 : i32
    scf.if %11 {
      %c0_10 = arith.constant 0 : index
      %c0_11 = arith.constant 0 : index
      %12 = vector.load %arg7[%c0_10, %c0_11] : memref<16x32xf32, #tpu.memory_space<vmem>>, vector<16x32xf32>
      %c0_12 = arith.constant 0 : index
      %c0_13 = arith.constant 0 : index
      %13 = vector.load %arg5[%c0_12, %c0_13] : memref<1x32xf32, #tpu.memory_space<vmem>>, vector<1x32xf32>
      %14 = vector.broadcast %13 : vector<1x32xf32> to vector<16x32xf32>
      %15 = arith.addf %12, %14 : vector<16x32xf32>
      %c0_14 = arith.constant 0 : index
      %c0_15 = arith.constant 0 : index
      %16 = vector.load %arg6[%c0_14, %c0_15] : memref<16x32xf32, #tpu.memory_space<vmem>>, vector<16x32xf32>
      tpu.vector_store %arg6[%c0_14, %c0_15], %15 {strides = array<i32>} : memref<16x32xf32, #tpu.memory_space<vmem>>, vector<16x32xf32>,
    } else {
    }
    return
  }
  func.func @transform_0(%arg0: i32, %arg1: i32, %arg2: i32) -> (i32, i32) {
    %c0_i32 = arith.constant 0 : i32
    return %arg0, %arg2 : i32, i32
  }
  func.func @transform_1(%arg0: i32, %arg1: i32, %arg2: i32) -> (i32, i32) {
    %c0_i32 = arith.constant 0 : i32
    return %arg2, %arg1 : i32, i32
  }
  func.func @transform_2(%arg0: i32, %arg1: i32, %arg2: i32) -> (i32, i32) {
    %c0_i32 = arith.constant 0 : i32
    %c0_i32_0 = arith.constant 0 : i32
    return %c0_i32, %arg1 : i32, i32
  }
  func.func @transform_3(%arg0: i32, %arg1: i32, %arg2: i32) -> (i32, i32) {
    %c0_i32 = arith.constant 0 : i32
    return %arg0, %arg1 : i32, i32
  }
}

module attributes {stable_mosaic.version = 11 : i64} {
  func.func @_matmul_kernel(%arg0: i32, %arg1: i32, %arg2: i32, %arg3: memref<16x32xf32, #tpu.memory_space<vmem>>, %arg4: memref<32x64xf32, #tpu.memory_space<vmem>>, %arg5: memref<1x64xf32, #tpu.memory_space<vmem>>, %arg6: memref<16x64xf32, #tpu.memory_space<vmem>>, %arg7: memref<16x64xf32, #tpu.memory_space<vmem>>) attributes {dimension_semantics = [#tpu.dimension_semantics<parallel>, #tpu.dimension_semantics<parallel>, #tpu.dimension_semantics<arbitrary>], iteration_bounds = array<i64: 1, 1, 1>, scalar_prefetch = 0 : i64, scratch_operands = 1 : i64, tpu.core_type = #tpu.core_type<tc>, window_params = [{transform_indices = @transform_0, window_bounds = array<i64: 16, 32>}, {transform_indices = @transform_1, window_bounds = array<i64: 32, 64>}, {transform_indices = @transform_2, window_bounds = array<i64: 1, 64>}, {transform_indices = @transform_3, window_bounds = array<i64: 16, 64>}]} {
    %c0_i32 = arith.constant 0 : i32
    %0 = arith.cmpi eq, %arg2, %c0_i32 : i32
    %1 = arith.extui %0 : i1 to i32
    %c0_i32_0 = arith.constant 0 : i32
    %2 = arith.cmpi ne, %1, %c0_i32_0 : i32
    scf.if %2 {
      %cst_10 = arith.constant 0.000000e+00 : f32
      %12 = vector.broadcast %cst_10 : f32 to vector<16x64xf32>
      %c0_11 = arith.constant 0 : index
      %c0_12 = arith.constant 0 : index
      %13 = vector.load %arg7[%c0_11, %c0_12] : memref<16x64xf32, #tpu.memory_space<vmem>>, vector<16x64xf32>
      tpu.vector_store %arg7[%c0_11, %c0_12], %12 {strides = array<i32>} : memref<16x64xf32, #tpu.memory_space<vmem>>, vector<16x64xf32>,
    } else {
    }
    %c0 = arith.constant 0 : index
    %c0_1 = arith.constant 0 : index
    %3 = vector.load %arg7[%c0, %c0_1] : memref<16x64xf32, #tpu.memory_space<vmem>>, vector<16x64xf32>
    %c0_2 = arith.constant 0 : index
    %c0_3 = arith.constant 0 : index
    %4 = vector.load %arg3[%c0_2, %c0_3] : memref<16x32xf32, #tpu.memory_space<vmem>>, vector<16x32xf32>
    %c0_4 = arith.constant 0 : index
    %c0_5 = arith.constant 0 : index
    %5 = vector.load %arg4[%c0_4, %c0_5] : memref<32x64xf32, #tpu.memory_space<vmem>>, vector<32x64xf32>
    %cst = arith.constant dense<0.000000e+00> : vector<16x64xf32>
    %6 = tpu.matmul %4, %5, %cst {dimension_numbers = #tpu.dot_dimension_numbers<[1], [0], [0], [1], [0, 0, 1, 1], [], []>} : vector<16x32xf32>, vector<32x64xf32>, vector<16x64xf32> -> vector<16x64xf32>
    %7 = arith.addf %3, %6 : vector<16x64xf32>
    %c0_6 = arith.constant 0 : index
    %c0_7 = arith.constant 0 : index
    %8 = vector.load %arg7[%c0_6, %c0_7] : memref<16x64xf32, #tpu.memory_space<vmem>>, vector<16x64xf32>
    tpu.vector_store %arg7[%c0_6, %c0_7], %7 {strides = array<i32>} : memref<16x64xf32, #tpu.memory_space<vmem>>, vector<16x64xf32>,
    %c0_i32_8 = arith.constant 0 : i32
    %9 = arith.cmpi eq, %arg2, %c0_i32_8 : i32
    %10 = arith.extui %9 : i1 to i32
    %c0_i32_9 = arith.constant 0 : i32
    %11 = arith.cmpi ne, %10, %c0_i32_9 : i32
    scf.if %11 {
      %c0_10 = arith.constant 0 : index
      %c0_11 = arith.constant 0 : index
      %12 = vector.load %arg7[%c0_10, %c0_11] : memref<16x64xf32, #tpu.memory_space<vmem>>, vector<16x64xf32>
      %c0_12 = arith.constant 0 : index
      %c0_13 = arith.constant 0 : index
      %13 = vector.load %arg5[%c0_12, %c0_13] : memref<1x64xf32, #tpu.memory_space<vmem>>, vector<1x64xf32>
      %14 = vector.broadcast %13 : vector<1x64xf32> to vector<16x64xf32>
      %15 = arith.addf %12, %14 : vector<16x64xf32>
      %cst_14 = arith.constant 0.000000e+00 : f32
      %16 = vector.broadcast %cst_14 : f32 to vector<16x64xf32>
      %17 = arith.maximumf %15, %16 : vector<16x64xf32>
      %c0_15 = arith.constant 0 : index
      %c0_16 = arith.constant 0 : index
      %18 = vector.load %arg6[%c0_15, %c0_16] : memref<16x64xf32, #tpu.memory_space<vmem>>, vector<16x64xf32>
      tpu.vector_store %arg6[%c0_15, %c0_16], %17 {strides = array<i32>} : memref<16x64xf32, #tpu.memory_space<vmem>>, vector<16x64xf32>,
    } else {
    }
    return
  }
  func.func @transform_0(%arg0: i32, %arg1: i32, %arg2: i32) -> (i32, i32) {
    %c0_i32 = arith.constant 0 : i32
    return %arg0, %arg2 : i32, i32
  }
  func.func @transform_1(%arg0: i32, %arg1: i32, %arg2: i32) -> (i32, i32) {
    %c0_i32 = arith.constant 0 : i32
    return %arg2, %arg1 : i32, i32
  }
  func.func @transform_2(%arg0: i32, %arg1: i32, %arg2: i32) -> (i32, i32) {
    %c0_i32 = arith.constant 0 : i32
    %c0_i32_0 = arith.constant 0 : i32
    return %c0_i32, %arg1 : i32, i32
  }
  func.func @transform_3(%arg0: i32, %arg1: i32, %arg2: i32) -> (i32, i32) {
    %c0_i32 = arith.constant 0 : i32
    return %arg0, %arg1 : i32, i32
  }
}

module attributes {stable_mosaic.version = 11 : i64} {
  func.func @_ln_kernel(%arg0: i32, %arg1: memref<16x32xf32, #tpu.memory_space<vmem>>, %arg2: memref<1x32xf32, #tpu.memory_space<vmem>>, %arg3: memref<1x32xf32, #tpu.memory_space<vmem>>, %arg4: memref<16x32xf32, #tpu.memory_space<vmem>>) attributes {dimension_semantics = [#tpu.dimension_semantics<parallel>], iteration_bounds = array<i64: 1>, scalar_prefetch = 0 : i64, scratch_operands = 0 : i64, tpu.core_type = #tpu.core_type<tc>, window_params = [{transform_indices = @transform_0, window_bounds = array<i64: 16, 32>}, {pipeline_mode = #tpu.pipeline_mode<synchronous>, transform_indices = @transform_1, window_bounds = array<i64: 1, 32>}, {pipeline_mode = #tpu.pipeline_mode<synchronous>, transform_indices = @transform_2, window_bounds = array<i64: 1, 32>}, {transform_indices = @transform_3, window_bounds = array<i64: 16, 32>}]} {
    %c0 = arith.constant 0 : index
    %c0_0 = arith.constant 0 : index
    %0 = vector.load %arg1[%c0, %c0_0] : memref<16x32xf32, #tpu.memory_space<vmem>>, vector<16x32xf32>
    %cst = arith.constant dense<0.000000e+00> : vector<16xf32>
    %1 = vector.multi_reduction <add>, %0, %cst [1] : vector<16x32xf32> to vector<16xf32>
    %2 = vector.shape_cast %1 : vector<16xf32> to vector<16x1xf32>
    %cst_1 = arith.constant 3.200000e+01 : f32
    %3 = vector.broadcast %cst_1 : f32 to vector<16x1xf32>
    %4 = arith.divf %2, %3 : vector<16x1xf32>
    %5 = vector.broadcast %4 : vector<16x1xf32> to vector<16x32xf32>
    %6 = arith.subf %0, %5 : vector<16x32xf32>
    %7 = arith.mulf %6, %6 : vector<16x32xf32>
    %cst_2 = arith.constant dense<0.000000e+00> : vector<16xf32>
    %8 = vector.multi_reduction <add>, %7, %cst_2 [1] : vector<16x32xf32> to vector<16xf32>
    %9 = vector.shape_cast %8 : vector<16xf32> to vector<16x1xf32>
    %cst_3 = arith.constant 3.200000e+01 : f32
    %10 = vector.broadcast %cst_3 : f32 to vector<16x1xf32>
    %11 = arith.divf %9, %10 : vector<16x1xf32>
    %cst_4 = arith.constant 9.99999974E-6 : f32
    %12 = vector.broadcast %cst_4 : f32 to vector<16x1xf32>
    %13 = arith.addf %11, %12 : vector<16x1xf32>
    %14 = math.rsqrt %13 : vector<16x1xf32>
    %15 = vector.broadcast %14 : vector<16x1xf32> to vector<16x32xf32>
    %16 = arith.mulf %6, %15 : vector<16x32xf32>
    %c0_5 = arith.constant 0 : index
    %c0_6 = arith.constant 0 : index
    %17 = vector.load %arg2[%c0_5, %c0_6] : memref<1x32xf32, #tpu.memory_space<vmem>>, vector<1x32xf32>
    %18 = vector.broadcast %17 : vector<1x32xf32> to vector<16x32xf32>
    %19 = arith.mulf %16, %18 : vector<16x32xf32>
    %c0_7 = arith.constant 0 : index
    %c0_8 = arith.constant 0 : index
    %20 = vector.load %arg3[%c0_7, %c0_8] : memref<1x32xf32, #tpu.memory_space<vmem>>, vector<1x32xf32>
    %21 = vector.broadcast %20 : vector<1x32xf32> to vector<16x32xf32>
    %22 = arith.addf %19, %21 : vector<16x32xf32>
    %c0_9 = arith.constant 0 : index
    %c0_10 = arith.constant 0 : index
    %23 = vector.load %arg4[%c0_9, %c0_10] : memref<16x32xf32, #tpu.memory_space<vmem>>, vector<16x32xf32>
    tpu.vector_store %arg4[%c0_9, %c0_10], %22 {strides = array<i32>} : memref<16x32xf32, #tpu.memory_space<vmem>>, vector<16x32xf32>,
    return
  }
  func.func @transform_0(%arg0: i32) -> (i32, i32) {
    %c0_i32 = arith.constant 0 : i32
    %c0_i32_0 = arith.constant 0 : i32
    return %arg0, %c0_i32 : i32, i32
  }
  func.func @transform_1(%arg0: i32) -> (i32, i32) {
    %c0_i32 = arith.constant 0 : i32
    %c0_i32_0 = arith.constant 0 : i32
    %c0_i32_1 = arith.constant 0 : i32
    return %c0_i32, %c0_i32_0 : i32, i32
  }
  func.func @transform_2(%arg0: i32) -> (i32, i32) {
    %c0_i32 = arith.constant 0 : i32
    %c0_i32_0 = arith.constant 0 : i32
    %c0_i32_1 = arith.constant 0 : i32
    return %c0_i32, %c0_i32_0 : i32, i32
  }
  func.func @transform_3(%arg0: i32) -> (i32, i32) {
    %c0_i32 = arith.constant 0 : i32
    %c0_i32_0 = arith.constant 0 : i32
    return %arg0, %c0_i32 : i32, i32
  }
}

module attributes {stable_mosaic.version = 11 : i64} {
  func.func @_matmul_kernel(%arg0: i32, %arg1: i32, %arg2: i32, %arg3: memref<16x32xf32, #tpu.memory_space<vmem>>, %arg4: memref<32x64xf32, #tpu.memory_space<vmem>>, %arg5: memref<1x64xf32, #tpu.memory_space<vmem>>, %arg6: memref<16x64xf32, #tpu.memory_space<vmem>>, %arg7: memref<16x64xf32, #tpu.memory_space<vmem>>) attributes {dimension_semantics = [#tpu.dimension_semantics<parallel>, #tpu.dimension_semantics<parallel>, #tpu.dimension_semantics<arbitrary>], iteration_bounds = array<i64: 1, 1, 1>, scalar_prefetch = 0 : i64, scratch_operands = 1 : i64, tpu.core_type = #tpu.core_type<tc>, window_params = [{transform_indices = @transform_0, window_bounds = array<i64: 16, 32>}, {transform_indices = @transform_1, window_bounds = array<i64: 32, 64>}, {transform_indices = @transform_2, window_bounds = array<i64: 1, 64>}, {transform_indices = @transform_3, window_bounds = array<i64: 16, 64>}]} {
    %c0_i32 = arith.constant 0 : i32
    %0 = arith.cmpi eq, %arg2, %c0_i32 : i32
    %1 = arith.extui %0 : i1 to i32
    %c0_i32_0 = arith.constant 0 : i32
    %2 = arith.cmpi ne, %1, %c0_i32_0 : i32
    scf.if %2 {
      %cst_10 = arith.constant 0.000000e+00 : f32
      %12 = vector.broadcast %cst_10 : f32 to vector<16x64xf32>
      %c0_11 = arith.constant 0 : index
      %c0_12 = arith.constant 0 : index
      %13 = vector.load %arg7[%c0_11, %c0_12] : memref<16x64xf32, #tpu.memory_space<vmem>>, vector<16x64xf32>
      tpu.vector_store %arg7[%c0_11, %c0_12], %12 {strides = array<i32>} : memref<16x64xf32, #tpu.memory_space<vmem>>, vector<16x64xf32>,
    } else {
    }
    %c0 = arith.constant 0 : index
    %c0_1 = arith.constant 0 : index
    %3 = vector.load %arg7[%c0, %c0_1] : memref<16x64xf32, #tpu.memory_space<vmem>>, vector<16x64xf32>
    %c0_2 = arith.constant 0 : index
    %c0_3 = arith.constant 0 : index
    %4 = vector.load %arg3[%c0_2, %c0_3] : memref<16x32xf32, #tpu.memory_space<vmem>>, vector<16x32xf32>
    %c0_4 = arith.constant 0 : index
    %c0_5 = arith.constant 0 : index
    %5 = vector.load %arg4[%c0_4, %c0_5] : memref<32x64xf32, #tpu.memory_space<vmem>>, vector<32x64xf32>
    %cst = arith.constant dense<0.000000e+00> : vector<16x64xf32>
    %6 = tpu.matmul %4, %5, %cst {dimension_numbers = #tpu.dot_dimension_numbers<[1], [0], [0], [1], [0, 0, 1, 1], [], []>} : vector<16x32xf32>, vector<32x64xf32>, vector<16x64xf32> -> vector<16x64xf32>
    %7 = arith.addf %3, %6 : vector<16x64xf32>
    %c0_6 = arith.constant 0 : index
    %c0_7 = arith.constant 0 : index
    %8 = vector.load %arg7[%c0_6, %c0_7] : memref<16x64xf32, #tpu.memory_space<vmem>>, vector<16x64xf32>
    tpu.vector_store %arg7[%c0_6, %c0_7], %7 {strides = array<i32>} : memref<16x64xf32, #tpu.memory_space<vmem>>, vector<16x64xf32>,
    %c0_i32_8 = arith.constant 0 : i32
    %9 = arith.cmpi eq, %arg2, %c0_i32_8 : i32
    %10 = arith.extui %9 : i1 to i32
    %c0_i32_9 = arith.constant 0 : i32
    %11 = arith.cmpi ne, %10, %c0_i32_9 : i32
    scf.if %11 {
      %c0_10 = arith.constant 0 : index
      %c0_11 = arith.constant 0 : index
      %12 = vector.load %arg7[%c0_10, %c0_11] : memref<16x64xf32, #tpu.memory_space<vmem>>, vector<16x64xf32>
      %c0_12 = arith.constant 0 : index
      %c0_13 = arith.constant 0 : index
      %13 = vector.load %arg5[%c0_12, %c0_13] : memref<1x64xf32, #tpu.memory_space<vmem>>, vector<1x64xf32>
      %14 = vector.broadcast %13 : vector<1x64xf32> to vector<16x64xf32>
      %15 = arith.addf %12, %14 : vector<16x64xf32>
      %c0_14 = arith.constant 0 : index
      %c0_15 = arith.constant 0 : index
      %16 = vector.load %arg6[%c0_14, %c0_15] : memref<16x64xf32, #tpu.memory_space<vmem>>, vector<16x64xf32>
      tpu.vector_store %arg6[%c0_14, %c0_15], %15 {strides = array<i32>} : memref<16x64xf32, #tpu.memory_space<vmem>>, vector<16x64xf32>,
    } else {
    }
    return
  }
  func.func @transform_0(%arg0: i32, %arg1: i32, %arg2: i32) -> (i32, i32) {
    %c0_i32 = arith.constant 0 : i32
    return %arg0, %arg2 : i32, i32
  }
  func.func @transform_1(%arg0: i32, %arg1: i32, %arg2: i32) -> (i32, i32) {
    %c0_i32 = arith.constant 0 : i32
    return %arg2, %arg1 : i32, i32
  }
  func.func @transform_2(%arg0: i32, %arg1: i32, %arg2: i32) -> (i32, i32) {
    %c0_i32 = arith.constant 0 : i32
    %c0_i32_0 = arith.constant 0 : i32
    return %c0_i32, %arg1 : i32, i32
  }
  func.func @transform_3(%arg0: i32, %arg1: i32, %arg2: i32) -> (i32, i32) {
    %c0_i32 = arith.constant 0 : i32
    return %arg0, %arg1 : i32, i32
  }
}

module attributes {stable_mosaic.version = 11 : i64} {
  func.func @_matmul_kernel(%arg0: i32, %arg1: i32, %arg2: i32, %arg3: memref<16x32xf32, #tpu.memory_space<vmem>>, %arg4: memref<32x100xf32, #tpu.memory_space<vmem>>, %arg5: memref<1x100xf32, #tpu.memory_space<vmem>>, %arg6: memref<16x100xf32, #tpu.memory_space<vmem>>, %arg7: memref<16x100xf32, #tpu.memory_space<vmem>>) attributes {dimension_semantics = [#tpu.dimension_semantics<parallel>, #tpu.dimension_semantics<parallel>, #tpu.dimension_semantics<arbitrary>], iteration_bounds = array<i64: 1, 1, 1>, scalar_prefetch = 0 : i64, scratch_operands = 1 : i64, tpu.core_type = #tpu.core_type<tc>, window_params = [{transform_indices = @transform_0, window_bounds = array<i64: 16, 32>}, {transform_indices = @transform_1, window_bounds = array<i64: 32, 100>}, {transform_indices = @transform_2, window_bounds = array<i64: 1, 100>}, {transform_indices = @transform_3, window_bounds = array<i64: 16, 100>}]} {
    %c0_i32 = arith.constant 0 : i32
    %0 = arith.cmpi eq, %arg2, %c0_i32 : i32
    %1 = arith.extui %0 : i1 to i32
    %c0_i32_0 = arith.constant 0 : i32
    %2 = arith.cmpi ne, %1, %c0_i32_0 : i32
    scf.if %2 {
      %cst_10 = arith.constant 0.000000e+00 : f32
      %12 = vector.broadcast %cst_10 : f32 to vector<16x100xf32>
      %c0_11 = arith.constant 0 : index
      %c0_12 = arith.constant 0 : index
      %13 = vector.load %arg7[%c0_11, %c0_12] : memref<16x100xf32, #tpu.memory_space<vmem>>, vector<16x100xf32>
      tpu.vector_store %arg7[%c0_11, %c0_12], %12 {strides = array<i32>} : memref<16x100xf32, #tpu.memory_space<vmem>>, vector<16x100xf32>,
    } else {
    }
    %c0 = arith.constant 0 : index
    %c0_1 = arith.constant 0 : index
    %3 = vector.load %arg7[%c0, %c0_1] : memref<16x100xf32, #tpu.memory_space<vmem>>, vector<16x100xf32>
    %c0_2 = arith.constant 0 : index
    %c0_3 = arith.constant 0 : index
    %4 = vector.load %arg3[%c0_2, %c0_3] : memref<16x32xf32, #tpu.memory_space<vmem>>, vector<16x32xf32>
    %c0_4 = arith.constant 0 : index
    %c0_5 = arith.constant 0 : index
    %5 = vector.load %arg4[%c0_4, %c0_5] : memref<32x100xf32, #tpu.memory_space<vmem>>, vector<32x100xf32>
    %cst = arith.constant dense<0.000000e+00> : vector<16x100xf32>
    %6 = tpu.matmul %4, %5, %cst {dimension_numbers = #tpu.dot_dimension_numbers<[1], [0], [0], [1], [0, 0, 1, 1], [], []>} : vector<16x32xf32>, vector<32x100xf32>, vector<16x100xf32> -> vector<16x100xf32>
    %7 = arith.addf %3, %6 : vector<16x100xf32>
    %c0_6 = arith.constant 0 : index
    %c0_7 = arith.constant 0 : index
    %8 = vector.load %arg7[%c0_6, %c0_7] : memref<16x100xf32, #tpu.memory_space<vmem>>, vector<16x100xf32>
    tpu.vector_store %arg7[%c0_6, %c0_7], %7 {strides = array<i32>} : memref<16x100xf32, #tpu.memory_space<vmem>>, vector<16x100xf32>,
    %c0_i32_8 = arith.constant 0 : i32
    %9 = arith.cmpi eq, %arg2, %c0_i32_8 : i32
    %10 = arith.extui %9 : i1 to i32
    %c0_i32_9 = arith.constant 0 : i32
    %11 = arith.cmpi ne, %10, %c0_i32_9 : i32
    scf.if %11 {
      %c0_10 = arith.constant 0 : index
      %c0_11 = arith.constant 0 : index
      %12 = vector.load %arg7[%c0_10, %c0_11] : memref<16x100xf32, #tpu.memory_space<vmem>>, vector<16x100xf32>
      %c0_12 = arith.constant 0 : index
      %c0_13 = arith.constant 0 : index
      %13 = vector.load %arg5[%c0_12, %c0_13] : memref<1x100xf32, #tpu.memory_space<vmem>>, vector<1x100xf32>
      %14 = vector.broadcast %13 : vector<1x100xf32> to vector<16x100xf32>
      %15 = arith.addf %12, %14 : vector<16x100xf32>
      %c0_14 = arith.constant 0 : index
      %c0_15 = arith.constant 0 : index
      %16 = vector.load %arg6[%c0_14, %c0_15] : memref<16x100xf32, #tpu.memory_space<vmem>>, vector<16x100xf32>
      tpu.vector_store %arg6[%c0_14, %c0_15], %15 {strides = array<i32>} : memref<16x100xf32, #tpu.memory_space<vmem>>, vector<16x100xf32>,
    } else {
    }
    return
  }
  func.func @transform_0(%arg0: i32, %arg1: i32, %arg2: i32) -> (i32, i32) {
    %c0_i32 = arith.constant 0 : i32
    return %arg0, %arg2 : i32, i32
  }
  func.func @transform_1(%arg0: i32, %arg1: i32, %arg2: i32) -> (i32, i32) {
    %c0_i32 = arith.constant 0 : i32
    return %arg2, %arg1 : i32, i32
  }
  func.func @transform_2(%arg0: i32, %arg1: i32, %arg2: i32) -> (i32, i32) {
    %c0_i32 = arith.constant 0 : i32
    %c0_i32_0 = arith.constant 0 : i32
    return %c0_i32, %arg1 : i32, i32
  }
  func.func @transform_3(%arg0: i32, %arg1: i32, %arg2: i32) -> (i32, i32) {
    %c0_i32 = arith.constant 0 : i32
    return %arg0, %arg1 : i32, i32
  }
}

</mosaic_0001>

<llo_original>
// kernel: llama_forward.43
$region0: #{llama_forward.43}
  #allocation0 [shape = 'u32[]', space=smem, size = 0x4, offset = 0x4, fixed_abs, tag = 'smem constant byte address 0x4 - core index']
  #allocation1 [shape = 'u32[72,128]{1,0:T(1,128)}', space=vmem, size = 0x9000, scoped, tag = 'internal scratch']
  #allocation2 [shape = 'f32[16,32]{1,0:T(8,128)}', space=vmem, size = 0x2000, scoped, tag = 'scratch operand']
  %s0 = inlined_call_operand.vmem [shape: f32[16,32], index: 0, kind: input, shape index: {}]
  %s1 = inlined_call_operand.vmem [shape: f32[32,32], index: 1, kind: input, shape index: {}]
  %s2 = inlined_call_operand.vmem [shape: f32[1,32], index: 2, kind: input, shape index: {}]
  %s3 = inlined_call_operand.vmem [shape: f32[16,32], index: 3, kind: output, shape index: {}]
  %s4 = sld [smem:[#allocation0]]
  $region30: #{llama_forward.43} parent=0
    _
  %s6 = ssub.s32 1, %s4
  %s7 = scalar_select 0, %s6, %s4
  // Predicated region
  $region2: #{llama_forward.43} parent=0 // pred_check
    _
  $region3: #{llama_forward.43} parent=0 // pred_check_branch
    %9 = sbr.rel (0) target = $region5
  $region4: #{llama_forward.43} parent=0 // pred_region
    _
  $region5: #{llama_forward.43} parent=0 // pred_fallthru
    _
  // Predicated region
  $region6: #{llama_forward.43} parent=0 // pred_check
    _
  $region7: #{llama_forward.43} parent=0 // pred_check_branch
    %11 = sbr.rel (0) target = $region9
  $region8: #{llama_forward.43} parent=0 // pred_region
    _
  $region9: #{llama_forward.43} parent=0 // pred_fallthru
    _
  // Predicated region
  $region10: #{llama_forward.43} parent=0 // pred_check
    _
  $region11: #{llama_forward.43} parent=0 // pred_check_branch
    %13 = sbr.rel (0) target = $region13
  $region12: #{llama_forward.43} parent=0 // pred_region
    _
  $region13: #{llama_forward.43} parent=0 // pred_fallthru
    _
  %p14 = scmp.eq.s32.totalorder 0, 0
  // Predicated region
  $region14: #{llama_forward.43} parent=0 // pred_check
    %p15 = pneg %p14
  $region15: #{llama_forward.43} parent=0 // pred_check_branch
    %17 = sbr.rel (%p15) target = $region17
  $region16: #{llama_forward.43} parent=0 // pred_region
    %vm18 = vcmask 261120
    %19 = vst.msk [vmem:[#allocation2] sm:$0xff] %vm18, 0.0
    %20 = vst.msk [vmem:[#allocation2 + $0x8] sm:$0xff] %vm18, 0.0
  $region17: #{llama_forward.43} parent=0 // pred_fallthru
    _
  %v21 = vld [vmem:[#allocation2] sm:$0xff]
  %v22 = vld [vmem:[#allocation2 + $0x8] sm:$0xff]
  %v23 = vld [vmem:[%s0] sm:$0xff]
  %v24 = vld [vmem:[%s0 + $0x8] sm:$0xff]
  %v25 = vld [vmem:[%s1] sm:$0xff]
  %v26 = vld [vmem:[%s1 + $0x8] sm:$0xff]
  %v27 = vld [vmem:[%s1 + $0x10] sm:$0xff]
  %v28 = vld [vmem:[%s1 + $0x18] sm:$0xff]
  %vm29 = vcmask 261120
  %v31 = vsel %vm29, %v23, 0
  %v34 = vsel %vm29, %v24, 0
  %36 = vmatpush.msra.mxu0 0.0
  %37 = vmatpush.msra.mxu0 0.0
  %38 = vmatpush.msra.mxu0 0.0
  %39 = vmatpush.msra.mxu0 0.0
  %40 = vmatpush.msra.mxu0 0.0
  %41 = vmatpush.msra.mxu0 0.0
  %42 = vmatpush.msra.mxu0 0.0
  %43 = vmatpush.msra.mxu0 0.0
  %44 = vmatpush.msra.mxu0 0.0
  %45 = vmatpush.msra.mxu0 0.0
  %46 = vmatpush.msra.mxu0 0.0
  %47 = vmatpush.msra.mxu0 0.0
  %48 = vmatpush.msra.mxu0 %v28
  %49 = vmatpush.msra.mxu0 %v27
  %50 = vmatpush.msra.mxu0 %v26
  %51 = vmatpush.msra.mxu0 %v25
  %52 = vmatmul.f32.gmra.mxu0 %v31
  %v53 = vpop.f32.mrf.mxu0
  %v54 = vadd.f32 0.0, %v53
  %55 = vmatmul.f32.gmra.mxu0 %v34
  %v56 = vpop.f32.mrf.mxu0
  %v57 = vadd.f32 0.0, %v56
  %58 = vdwg.mxu0
  %v59 = vadd.f32 %v21, %v54
  %v60 = vadd.f32 %v22, %v57
  %61 = vst.msk [vmem:[#allocation2] sm:$0xff] %vm29, %v59
  %62 = vst.msk [vmem:[#allocation2 + $0x8] sm:$0xff] %vm29, %v60
  // Predicated region
  $region18: #{llama_forward.43} parent=0 // pred_check
    %p63 = pneg %p14
  $region19: #{llama_forward.43} parent=0 // pred_check_branch
    %65 = sbr.rel (%p63) target = $region21
  $region20: #{llama_forward.43} parent=0 // pred_region
    %v66 = vld [vmem:[#allocation2] sm:$0xff]
    %v67 = vld [vmem:[#allocation2 + $0x8] sm:$0xff]
    %v68 = vld [vmem:[%s2] sm:$0x1]
    %v70 = vperm.slane %v68, 0
    %v72 = vadd.f32 %v66, %v70
    %v73 = vadd.f32 %v67, %v70
    %74 = vst.msk [vmem:[%s3] sm:$0xff] %vm29, %v72
    %75 = vst.msk [vmem:[%s3 + $0x8] sm:$0xff] %vm29, %v73
  $region21: #{llama_forward.43} parent=0 // pred_fallthru
    _
  // Predicated region
  $region22: #{llama_forward.43} parent=0 // pred_check
    _
  $region23: #{llama_forward.43} parent=0 // pred_check_branch
    %77 = sbr.rel (0) target = $region25
  $region24: #{llama_forward.43} parent=0 // pred_region
    _
  $region25: #{llama_forward.43} parent=0 // pred_fallthru
    _
  // Predicated region
  $region26: #{llama_forward.43} parent=0 // pred_check
    _
  $region27: #{llama_forward.43} parent=0 // pred_check_branch
    %79 = sbr.rel (0) target = $region29
  $region28: #{llama_forward.43} parent=0 // pred_region
    _
  $region29: #{llama_forward.43} parent=0 // pred_fallthru
    _

// kernel: llama_forward.41
$region0: #{llama_forward.41}
  #allocation0 [shape = 'u32[]', space=smem, size = 0x4, offset = 0x4, fixed_abs, tag = 'smem constant byte address 0x4 - core index']
  #allocation1 [shape = 'u32[72,128]{1,0:T(1,128)}', space=vmem, size = 0x9000, scoped, tag = 'internal scratch']
  #allocation2 [shape = 'f32[16,96]{1,0:T(8,128)}', space=vmem, size = 0x2000, scoped, tag = 'scratch operand']
  %s0 = inlined_call_operand.vmem [shape: f32[16,32], index: 0, kind: input, shape index: {}]
  %s1 = inlined_call_operand.vmem [shape: f32[32,96], index: 1, kind: input, shape index: {}]
  %s2 = inlined_call_operand.vmem [shape: f32[1,96], index: 2, kind: input, shape index: {}]
  %s3 = inlined_call_operand.vmem [shape: f32[16,96], index: 3, kind: output, shape index: {}]
  %s4 = sld [smem:[#allocation0]]
  $region30: #{llama_forward.41} parent=0
    _
  %s6 = ssub.s32 1, %s4
  %s7 = scalar_select 0, %s6, %s4
  // Predicated region
  $region2: #{llama_forward.41} parent=0 // pred_check
    _
  $region3: #{llama_forward.41} parent=0 // pred_check_branch
    %9 = sbr.rel (0) target = $region5
  $region4: #{llama_forward.41} parent=0 // pred_region
    _
  $region5: #{llama_forward.41} parent=0 // pred_fallthru
    _
  // Predicated region
  $region6: #{llama_forward.41} parent=0 // pred_check
    _
  $region7: #{llama_forward.41} parent=0 // pred_check_branch
    %11 = sbr.rel (0) target = $region9
  $region8: #{llama_forward.41} parent=0 // pred_region
    _
  $region9: #{llama_forward.41} parent=0 // pred_fallthru
    _
  // Predicated region
  $region10: #{llama_forward.41} parent=0 // pred_check
    _
  $region11: #{llama_forward.41} parent=0 // pred_check_branch
    %13 = sbr.rel (0) target = $region13
  $region12: #{llama_forward.41} parent=0 // pred_region
    _
  $region13: #{llama_forward.41} parent=0 // pred_fallthru
    _
  %p14 = scmp.eq.s32.totalorder 0, 0
  // Predicated region
  $region14: #{llama_forward.41} parent=0 // pred_check
    %p15 = pneg %p14
  $region15: #{llama_forward.41} parent=0 // pred_check_branch
    %17 = sbr.rel (%p15) target = $region17
  $region16: #{llama_forward.41} parent=0 // pred_region
    %vm18 = vcmask 785408
    %19 = vst.msk [vmem:[#allocation2] sm:$0xff] %vm18, 0.0
    %20 = vst.msk [vmem:[#allocation2 + $0x8] sm:$0xff] %vm18, 0.0
  $region17: #{llama_forward.41} parent=0 // pred_fallthru
    _
  %v21 = vld [vmem:[#allocation2] sm:$0xff]
  %v22 = vld [vmem:[#allocation2 + $0x8] sm:$0xff]
  %v23 = vld [vmem:[%s0] sm:$0xff]
  %v24 = vld [vmem:[%s0 + $0x8] sm:$0xff]
  %v25 = vld [vmem:[%s1] sm:$0xff]
  %v26 = vld [vmem:[%s1 + $0x8] sm:$0xff]
  %v27 = vld [vmem:[%s1 + $0x10] sm:$0xff]
  %v28 = vld [vmem:[%s1 + $0x18] sm:$0xff]
  %vm29 = vcmask 261120
  %v31 = vsel %vm29, %v23, 0
  %v34 = vsel %vm29, %v24, 0
  %36 = vmatpush.msra.mxu0 0.0
  %37 = vmatpush.msra.mxu0 0.0
  %38 = vmatpush.msra.mxu0 0.0
  %39 = vmatpush.msra.mxu0 0.0
  %40 = vmatpush.msra.mxu0 0.0
  %41 = vmatpush.msra.mxu0 0.0
  %42 = vmatpush.msra.mxu0 0.0
  %43 = vmatpush.msra.mxu0 0.0
  %44 = vmatpush.msra.mxu0 0.0
  %45 = vmatpush.msra.mxu0 0.0
  %46 = vmatpush.msra.mxu0 0.0
  %47 = vmatpush.msra.mxu0 0.0
  %48 = vmatpush.msra.mxu0 %v28
  %49 = vmatpush.msra.mxu0 %v27
  %50 = vmatpush.msra.mxu0 %v26
  %51 = vmatpush.msra.mxu0 %v25
  %52 = vmatmul.f32.gmra.mxu0 %v31
  %v53 = vpop.f32.mrf.mxu0
  %v54 = vadd.f32 0.0, %v53
  %55 = vmatmul.f32.gmra.mxu0 %v34
  %v56 = vpop.f32.mrf.mxu0
  %v57 = vadd.f32 0.0, %v56
  %58 = vdwg.mxu0
  %v59 = vadd.f32 %v21, %v54
  %v60 = vadd.f32 %v22, %v57
  %vm61 = vcmask 785408
  %62 = vst.msk [vmem:[#allocation2] sm:$0xff] %vm61, %v59
  %63 = vst.msk [vmem:[#allocation2 + $0x8] sm:$0xff] %vm61, %v60
  // Predicated region
  $region18: #{llama_forward.41} parent=0 // pred_check
    %p64 = pneg %p14
  $region19: #{llama_forward.41} parent=0 // pred_check_branch
    %66 = sbr.rel (%p64) target = $region21
  $region20: #{llama_forward.41} parent=0 // pred_region
    %v67 = vld [vmem:[#allocation2] sm:$0xff]
    %v68 = vld [vmem:[#allocation2 + $0x8] sm:$0xff]
    %v69 = vld [vmem:[%s2] sm:$0x1]
    %v71 = vperm.slane %v69, 0
    %v73 = vadd.f32 %v67, %v71
    %v74 = vadd.f32 %v68, %v71
    %75 = vst.msk [vmem:[%s3] sm:$0xff] %vm61, %v73
    %76 = vst.msk [vmem:[%s3 + $0x8] sm:$0xff] %vm61, %v74
  $region21: #{llama_forward.41} parent=0 // pred_fallthru
    _
  // Predicated region
  $region22: #{llama_forward.41} parent=0 // pred_check
    _
  $region23: #{llama_forward.41} parent=0 // pred_check_branch
    %78 = sbr.rel (0) target = $region25
  $region24: #{llama_forward.41} parent=0 // pred_region
    _
  $region25: #{llama_forward.41} parent=0 // pred_fallthru
    _
  // Predicated region
  $region26: #{llama_forward.41} parent=0 // pred_check
    _
  $region27: #{llama_forward.41} parent=0 // pred_check_branch
    %80 = sbr.rel (0) target = $region29
  $region28: #{llama_forward.41} parent=0 // pred_region
    _
  $region29: #{llama_forward.41} parent=0 // pred_fallthru
    _

// kernel: llama_forward.44
$region0: #{llama_forward.44}
  #allocation0 [shape = 'u32[]', space=smem, size = 0x4, offset = 0x4, fixed_abs, tag = 'smem constant byte address 0x4 - core index']
  #allocation1 [shape = 'u32[72,128]{1,0:T(1,128)}', space=vmem, size = 0x9000, scoped, tag = 'internal scratch']
  %s0 = inlined_call_operand.vmem [shape: f32[16,32], index: 0, kind: input, shape index: {}]
  %s1 = inlined_call_operand.vmem [shape: f32[16,32], index: 1, kind: input, shape index: {}]
  %s2 = inlined_call_operand.vmem [shape: f32[1,32], index: 2, kind: input, shape index: {}]
  %s3 = inlined_call_operand.vmem [shape: f32[1,32], index: 3, kind: input, shape index: {}]
  %s4 = inlined_call_operand.vmem [shape: f32[16,32], index: 4, kind: output, shape index: {}]
  %s5 = sld [smem:[#allocation0]]
  $region26: #{llama_forward.44} parent=0
    _
  %s7 = ssub.s32 1, %s5
  %s8 = scalar_select 0, %s7, %s5
  // Predicated region
  $region2: #{llama_forward.44} parent=0 // pred_check
    _
  $region3: #{llama_forward.44} parent=0 // pred_check_branch
    %10 = sbr.rel (0) target = $region5
  $region4: #{llama_forward.44} parent=0 // pred_region
    _
  $region5: #{llama_forward.44} parent=0 // pred_fallthru
    _
  // Predicated region
  $region6: #{llama_forward.44} parent=0 // pred_check
    _
  $region7: #{llama_forward.44} parent=0 // pred_check_branch
    %12 = sbr.rel (0) target = $region9
  $region8: #{llama_forward.44} parent=0 // pred_region
    _
  $region9: #{llama_forward.44} parent=0 // pred_fallthru
    _
  // Predicated region
  $region10: #{llama_forward.44} parent=0 // pred_check
    _
  $region11: #{llama_forward.44} parent=0 // pred_check_branch
    %14 = sbr.rel (0) target = $region13
  $region12: #{llama_forward.44} parent=0 // pred_region
    _
  $region13: #{llama_forward.44} parent=0 // pred_fallthru
    _
  // Predicated region
  $region14: #{llama_forward.44} parent=0 // pred_check
    _
  $region15: #{llama_forward.44} parent=0 // pred_check_branch
    %16 = sbr.rel (0) target = $region17
  $region16: #{llama_forward.44} parent=0 // pred_region
    _
  $region17: #{llama_forward.44} parent=0 // pred_fallthru
    _
  %v17 = vld [vmem:[%s0] sm:$0xff]
  %v18 = vld [vmem:[%s0 + $0x8] sm:$0xff]
  %v19 = vld [vmem:[%s1] sm:$0xff]
  %v20 = vld [vmem:[%s1 + $0x8] sm:$0xff]
  %v21 = vadd.f32 %v17, %v19
  %v22 = vadd.f32 %v18, %v20
  %vm23 = vcmask 261120
  %v24 = vsel %vm23, %v21, 0.0
  %25 = vadd.xlane.f32.xlu0 %v24
  %v26 = vpop.xlane.xlu0 %25
  %v27 = vsel %vm23, %v22, 0.0
  %28 = vadd.xlane.f32.xlu0 %v27
  %v29 = vpop.xlane.xlu0 %28
  %v30 = vrcp.pop 32.0
  %v31 = vmul.f32 32.0, %v30
  %v32 = vsub.f32 1.0, %v31
  %v33 = vmul.f32 %v30, %v32
  %v34 = vadd.f32 %v30, %v33
  %vm35 = vweird.f32 %v30
  %v36 = vsel %vm35, %v30, %v34
  %v37 = vmul.f32 %v26, %v36
  %v38 = vmul.f32 %v29, %v36
  %v39 = vsub.f32 %v21, %v37
  %v40 = vsub.f32 %v22, %v38
  %v41 = vmul.f32 %v39, %v39
  %v42 = vmul.f32 %v40, %v40
  %v43 = vsel %vm23, %v41, 0.0
  %44 = vadd.xlane.f32.xlu0 %v43
  %v45 = vpop.xlane.xlu0 %44
  %v46 = vsel %vm23, %v42, 0.0
  %47 = vadd.xlane.f32.xlu0 %v46
  %v48 = vpop.xlane.xlu0 %47
  %v49 = vmul.f32 %v45, %v36
  %v50 = vmul.f32 %v48, %v36
  %v51 = vadd.f32 %v49, 1e-05
  %v52 = vadd.f32 %v50, 1e-05
  %v53 = vrsqrt.pop %v51
  %v54 = vmul.f32 %v53, %v51
  %v55 = vmul.f32 %v54, %v53
  %v56 = vmul.f32 0.5, %v55
  %v57 = vsub.f32 1.5, %v56
  %v58 = vmul.f32 %v53, %v57
  %vm59 = vweird.f32 %v51
  %vm60 = vweird.f32 %v53
  %vm61 = vmor %vm59, %vm60
  %v62 = vsel %vm61, %v53, %v58
  %v63 = vrsqrt.pop %v52
  %v64 = vmul.f32 %v63, %v52
  %v65 = vmul.f32 %v64, %v63
  %v66 = vmul.f32 0.5, %v65
  %v67 = vsub.f32 1.5, %v66
  %v68 = vmul.f32 %v63, %v67
  %vm69 = vweird.f32 %v52
  %vm70 = vweird.f32 %v63
  %vm71 = vmor %vm69, %vm70
  %v72 = vsel %vm71, %v63, %v68
  %v73 = vmul.f32 %v39, %v62
  %v74 = vmul.f32 %v40, %v72
  %v75 = vld [vmem:[%s2] sm:$0x1]
  %v77 = vperm.slane %v75, 0
  %v79 = vmul.f32 %v73, %v77
  %v80 = vmul.f32 %v74, %v77
  %v81 = vld [vmem:[%s3] sm:$0x1]
  %v83 = vperm.slane %v81, 0
  %v85 = vadd.f32 %v79, %v83
  %v86 = vadd.f32 %v80, %v83
  %87 = vst.msk [vmem:[%s4] sm:$0xff] %vm23, %v85
  %88 = vst.msk [vmem:[%s4 + $0x8] sm:$0xff] %vm23, %v86
  // Predicated region
  $region18: #{llama_forward.44} parent=0 // pred_check
    _
  $region19: #{llama_forward.44} parent=0 // pred_check_branch
    %90 = sbr.rel (0) target = $region21
  $region20: #{llama_forward.44} parent=0 // pred_region
    _
  $region21: #{llama_forward.44} parent=0 // pred_fallthru
    _
  // Predicated region
  $region22: #{llama_forward.44} parent=0 // pred_check
    _
  $region23: #{llama_forward.44} parent=0 // pred_check_branch
    %92 = sbr.rel (0) target = $region25
  $region24: #{llama_forward.44} parent=0 // pred_region
    _
  $region25: #{llama_forward.44} parent=0 // pred_fallthru
    _

// kernel: llama_forward.42
$region0: #{llama_forward.42}
  #allocation0 [shape = 'u32[]', space=smem, size = 0x4, offset = 0x4, fixed_abs, tag = 'smem constant byte address 0x4 - core index']
  #allocation1 [shape = 'u32[72,128]{1,0:T(1,128)}', space=vmem, size = 0x9000, scoped, tag = 'internal scratch']
  %s0 = inlined_call_operand.vmem [shape: f32[2,8,32], index: 0, kind: input, shape index: {}]
  %s1 = inlined_call_operand.vmem [shape: f32[2,8,64], index: 1, kind: input, shape index: {}]
  %s2 = inlined_call_operand.vmem [shape: f32[2,8,32], index: 2, kind: output, shape index: {}]
  %s3 = sld [smem:[#allocation0]]
  $region41: #{llama_forward.42} parent=0
    _
  %s5 = ssub.s32 1, %s3
  %s6 = scalar_select 0, %s5, %s3
  loop: start=0, step=1, limit=4
  $region2: #{llama_forward.42} parent=0 // loop_pre_header
    _
  $region3: #{llama_forward.42} parent=0 // loop_header
    %s8 = sphi 0, %s12
    %p9 = scmp.ge.s32.totalorder %s8, 4
    %s15 = sphi 0, %s27
    %s16 = sphi 0, %s23
    %s17 = sphi 0, %s15
    %s18 = sphi 0, %s16
    %s19 = sphi 0, %s17
    %s20 = sphi 0, %s18
    %s32 = sphi 0, %s34
    %s35 = sphi 0, %s32
    %s36 = sphi 0, %s35
    %s52 = sphi 0, %s36
    %s58 = sphi 0, %s60
    %s61 = sphi 0, %s58
    %s62 = sphi 0, %s61
    %s78 = sphi 0, %s62
    %s86 = sphi 0, %s88
    %s89 = sphi 0, %s86
    %s90 = sphi 0, %s89
    %s106 = sphi 0, %s90
  $region4: #{llama_forward.42} parent=0 // loop_header_branch
    %11 = sbr.rel (%p9) target = $region8
  $region5: #{llama_forward.42} parent=0 // loop_body
    %s13 = ssub.s32 %s8, 1
    %s14 = ssub.s32 %s8, 2
    %s21 = sadd.s32 1, %s16
    %p22 = scmp.ge.s32.totalorder %s21, 1
    %s23 = scalar_select %p22, 0, %s21
    %s24 = sadd.s32 1, %s15
    %s25 = scalar_select %p22, %s24, %s15
    %p26 = scmp.ge.s32.totalorder %s25, 2
    %s27 = scalar_select %p26, 0, %s25
    %s28 = ssub.s32 %s15, %s27
    %s29 = ssub.s32 %s16, %s23
    %s30 = sor.u32 %s28, %s29
    %p31 = scmp.eq.s32.totalorder %s30, 0
    %s33 = sadd.s32 %s32, 1
    %s34 = scalar_select %p31, %s32, %s33
    %p37 = pneg %p31
    %p38 = scmp.eq.s32.totalorder %s8, 1
    %p39 = por %p37, %p38
    %p40 = scmp.ne.s32.totalorder %s32, %s35
    %p41 = scmp.eq.s32.totalorder %s8, 0
    %p42 = por %p40, %p41
    %p43 = scmp.ne.s32.totalorder %s32, %s35
    %p44 = scmp.eq.s32.totalorder %s13, 1
    %p45 = por %p43, %p44
    %p46 = scmp.ne.s32.totalorder %s35, %s36
    %p47 = scmp.eq.s32.totalorder %s13, 0
    %p48 = por %p46, %p47
    %p49 = scmp.ne.s32.totalorder %s35, %s36
    %p50 = scmp.eq.s32.totalorder %s14, 1
    %p51 = por %p49, %p50
    %p53 = scmp.ne.s32.totalorder %s36, %s52
    %p54 = scmp.eq.s32.totalorder %s14, 0
    %p55 = por %p53, %p54
    %s56 = ssub.s32 %s15, %s27
    %p57 = scmp.eq.s32.totalorder %s56, 0
    %s59 = sadd.s32 %s58, 1
    %s60 = scalar_select %p57, %s58, %s59
    %p63 = pneg %p57
    %p64 = scmp.eq.s32.totalorder %s8, 1
    %p65 = por %p63, %p64
    %p66 = scmp.ne.s32.totalorder %s58, %s61
    %p67 = scmp.eq.s32.totalorder %s8, 0
    %p68 = por %p66, %p67
    %p69 = scmp.ne.s32.totalorder %s58, %s61
    %p70 = scmp.eq.s32.totalorder %s13, 1
    %p71 = por %p69, %p70
    %p72 = scmp.ne.s32.totalorder %s61, %s62
    %p73 = scmp.eq.s32.totalorder %s13, 0
    %p74 = por %p72, %p73
    %p75 = scmp.ne.s32.totalorder %s61, %s62
    %p76 = scmp.eq.s32.totalorder %s14, 1
    %p77 = por %p75, %p76
    %p79 = scmp.ne.s32.totalorder %s62, %s78
    %p80 = scmp.eq.s32.totalorder %s14, 0
    %p81 = por %p79, %p80
    %s82 = ssub.s32 %s15, %s27
    %s83 = ssub.s32 %s16, %s23
    %s84 = sor.u32 %s82, %s83
    %p85 = scmp.eq.s32.totalorder %s84, 0
    %s87 = sadd.s32 %s86, 1
    %s88 = scalar_select %p85, %s86, %s87
    %p91 = pneg %p85
    %p92 = scmp.eq.s32.totalorder %s8, 1
    %p93 = por %p91, %p92
    %p94 = scmp.ne.s32.totalorder %s86, %s89
    %p95 = scmp.eq.s32.totalorder %s8, 0
    %p96 = por %p94, %p95
    %p97 = scmp.ne.s32.totalorder %s86, %s89
    %p98 = scmp.eq.s32.totalorder %s13, 1
    %p99 = por %p97, %p98
    %p100 = scmp.ne.s32.totalorder %s89, %s90
    %p101 = scmp.eq.s32.totalorder %s13, 0
    %p102 = por %p100, %p101
    %p103 = scmp.ne.s32.totalorder %s89, %s90
    %p104 = scmp.eq.s32.totalorder %s14, 1
    %p105 = por %p103, %p104
    %p107 = scmp.ne.s32.totalorder %s90, %s106
    %p108 = scmp.eq.s32.totalorder %s14, 0
    %p109 = por %p107, %p108
    %p110 = scmp.le.s32.totalorder 1, %s8
    %p111 = scmp.lt.s32.totalorder %s8, 3
    %p112 = pnand %p110, %p111
    %p113 = pneg %p112
    // Predicated region
    $region9: #{llama_forward.42} parent=5 // pred_check
      _
    $region10: #{llama_forward.42} parent=5 // pred_check_branch
      %115 = sbr.rel (%p112) target = $region12
    $region11: #{llama_forward.42} parent=5 // pred_region
      %s116 = ssub.s32 %s8, 1
    $region12: #{llama_forward.42} parent=5 // pred_fallthru
      _
    %p117 = scmp.lt.s32.totalorder %s8, 2
    // Predicated region
    $region13: #{llama_forward.42} parent=5 // pred_check
      %p118 = pneg %p117
    $region14: #{llama_forward.42} parent=5 // pred_check_branch
      %120 = sbr.rel (%p118) target = $region16
    $region15: #{llama_forward.42} parent=5 // pred_region
      // Predicated region
      $region17: #{llama_forward.42} parent=15 // pred_check
        %p121 = pneg %p42
      $region18: #{llama_forward.42} parent=15 // pred_check_branch
        %123 = sbr.rel (%p121) target = $region20
      $region19: #{llama_forward.42} parent=15 // pred_region
        %p124 = scmp.lt.s32.totalorder %s15, 1
        %s125 = scalar_select %p124, %s15, 1
        %p126 = scmp.lt.s32.totalorder %s16, 0
        %s127 = scalar_select %p126, %s16, 0
        %s128 = sadd.s32 %s127, %s125
        %s129 = smul.addr %s128, 8
        %s130 = scalar_lea.vmem %s0, %s129
      $region20: #{llama_forward.42} parent=15 // pred_fallthru
        _
      // Predicated region
      $region21: #{llama_forward.42} parent=15 // pred_check
        %p131 = pneg %p68
      $region22: #{llama_forward.42} parent=15 // pred_check_branch
        %133 = sbr.rel (%p131) target = $region24
      $region23: #{llama_forward.42} parent=15 // pred_region
        %p134 = scmp.lt.s32.totalorder %s15, 1
        %s135 = scalar_select %p134, %s15, 1
        %s136 = smul.addr %s135, 8
        %s137 = scalar_lea.vmem %s1, %s136
      $region24: #{llama_forward.42} parent=15 // pred_fallthru
        _
    $region16: #{llama_forward.42} parent=5 // pred_fallthru
      _
    %p138 = scmp.le.s32.totalorder 1, %s8
    %p139 = scmp.lt.s32.totalorder %s8, 3
    %p140 = pnand %p138, %p139
    %p141 = pneg %p140
    // Predicated region
    $region25: #{llama_forward.42} parent=5 // pred_check
      _
    $region26: #{llama_forward.42} parent=5 // pred_check_branch
      %143 = sbr.rel (%p140) target = $region28
    $region27: #{llama_forward.42} parent=5 // pred_region
      %s144 = ssub.s32 %s8, 1
      %p145 = scmp.lt.s32.totalorder %s17, 1
      %s146 = scalar_select %p145, %s17, 1
      %p147 = scmp.lt.s32.totalorder %s18, 0
      %s148 = scalar_select %p147, %s18, 0
      %s149 = sadd.s32 %s148, %s146
      %s150 = smul.addr %s149, 8
      %s151 = scalar_lea.vmem %s0, %s150
      %p152 = pneg %p48
      %p153 = pneg %p45
      %p154 = scmp.lt.s32.totalorder %s17, 1
      %s155 = scalar_select %p154, %s17, 1
      %s156 = smul.addr %s155, 8
      %s157 = scalar_lea.vmem %s1, %s156
      %p158 = pneg %p74
      %p159 = pneg %p71
      %p160 = pneg %p102
      %p161 = pneg %p99
      %p162 = scmp.lt.s32.totalorder %s17, 1
      %s163 = scalar_select %p162, %s17, 1
      %p164 = scmp.lt.s32.totalorder %s18, 0
      %s165 = scalar_select %p164, %s18, 0
      %s166 = sadd.s32 %s165, %s163
      %s167 = smul.addr %s166, 8
      %s168 = scalar_lea.vmem %s2, %s167
      %p169 = scmp.lt.s32.totalorder %s17, 1
      %s170 = scalar_select %p169, %s17, 1
      %p171 = scmp.lt.s32.totalorder %s18, 0
      %s172 = scalar_select %p171, %s18, 0
      %s173 = sadd.s32 %s172, %s170
      %s174 = smul.addr %s173, 8
      %s175 = scalar_lea.vmem %s0, %s174
      %p176 = scmp.lt.s32.totalorder %s17, 1
      %s177 = scalar_select %p176, %s17, 1
      %s178 = smul.addr %s177, 8
      %s179 = scalar_lea.vmem %s1, %s178
      %p180 = scmp.lt.s32.totalorder %s17, 1
      %s181 = scalar_select %p180, %s17, 1
      %p182 = scmp.lt.s32.totalorder %s18, 0
      %s183 = scalar_select %p182, %s18, 0
      %s184 = sadd.s32 %s183, %s181
      %s185 = smul.addr %s184, 8
      %s186 = scalar_lea.vmem %s2, %s185
      %v187 = vld [vmem:[%s175] sm:$0xff]
      %v188 = vmul.f32 %v187, 0.35355338
      %v189 = vld [vmem:[%s179] sm:$0xff]
      %vm190 = vcmask 64512
      %v192 = vsel %vm190, %v188, 0
      %v195 = vsel %vm190, %v189, 0
      %197 = vmatpush.xpose.msra.mxu0 0.0
      %198 = vmatpush.xpose.msra.mxu0 0.0
      %199 = vmatpush.xpose.msra.mxu0 0.0
      %200 = vmatpush.xpose.msra.mxu0 0.0
      %201 = vmatpush.xpose.msra.mxu0 0.0
      %202 = vmatpush.xpose.msra.mxu0 0.0
      %203 = vmatpush.xpose.msra.mxu0 0.0
      %204 = vmatpush.xpose.msra.mxu0 0.0
      %205 = vmatpush.xpose.msra.mxu0 0.0
      %206 = vmatpush.xpose.msra.mxu0 0.0
      %207 = vmatpush.xpose.msra.mxu0 0.0
      %208 = vmatpush.xpose.msra.mxu0 0.0
      %209 = vmatpush.xpose.msra.mxu0 0.0
      %210 = vmatpush.xpose.msra.mxu0 0.0
      %211 = vmatpush.xpose.msra.mxu0 0.0
      %212 = vmatpush.xpose.msra.mxu0 %v195
      %213 = vmatmul.f32.gmra.mxu0 %v192
      %v214 = vpop.f32.mrf.mxu0
      %v215 = vadd.f32 0.0, %v214
      %216 = vdwg.mxu0
      %v217 = vsel %vm190, %v215, -inf
      %218 = vmax.xlane.f32.xlu0 %v217
      %v219 = vpop.xlane.xlu0 %218
      %v220 = vsub.f32 %v215, %v219
      %v221 = vmul.f32 %v220, 1.442695
      %v222 = vpow.pop %v221
      %v223 = vsel %vm190, %v222, 0.0
      %224 = vadd.xlane.f32.xlu0 %v223
      %v225 = vpop.xlane.xlu0 %224
      %226 = vrot.lane.b32.xlu0 %v189, 96
      %v227 = vpop.permute.xlu0 %226
      %v230 = vsel %vm190, %v222, 0
      %232 = vmatpush.msra.mxu0 0.0
      %233 = vmatpush.msra.mxu0 0.0
      %234 = vmatpush.msra.mxu0 0.0
      %235 = vmatpush.msra.mxu0 0.0
      %236 = vmatpush.msra.mxu0 0.0
      %237 = vmatpush.msra.mxu0 0.0
      %238 = vmatpush.msra.mxu0 0.0
      %239 = vmatpush.msra.mxu0 0.0
      %240 = vmatpush.msra.mxu0 0.0
      %241 = vmatpush.msra.mxu0 0.0
      %242 = vmatpush.msra.mxu0 0.0
      %243 = vmatpush.msra.mxu0 0.0
      %244 = vmatpush.msra.mxu0 0.0
      %245 = vmatpush.msra.mxu0 0.0
      %246 = vmatpush.msra.mxu0 0.0
      %247 = vmatpush.msra.mxu0 %v227
      %248 = vmatmul.f32.gmra.mxu0 %v230
      %v249 = vpop.f32.mrf.mxu0
      %v250 = vadd.f32 0.0, %v249
      %251 = vdwg.mxu0
      %v252 = vrcp.pop %v225
      %v253 = vmul.f32 %v250, %v252
      %254 = vrot.lane.b32.xlu0 %v188, 120
      %v255 = vpop.permute.xlu0 %254
      %256 = vrot.lane.b32.xlu0 %v189, 120
      %v257 = vpop.permute.xlu0 %256
      %v258 = vsel %vm190, %v255, 0
      %v260 = vsel %vm190, %v257, 0
      %262 = vmatpush.xpose.msra.mxu0 0.0
      %263 = vmatpush.xpose.msra.mxu0 0.0
      %264 = vmatpush.xpose.msra.mxu0 0.0
      %265 = vmatpush.xpose.msra.mxu0 0.0
      %266 = vmatpush.xpose.msra.mxu0 0.0
      %267 = vmatpush.xpose.msra.mxu0 0.0
      %268 = vmatpush.xpose.msra.mxu0 0.0
      %269 = vmatpush.xpose.msra.mxu0 0.0
      %270 = vmatpush.xpose.msra.mxu0 0.0
      %271 = vmatpush.xpose.msra.mxu0 0.0
      %272 = vmatpush.xpose.msra.mxu0 0.0
      %273 = vmatpush.xpose.msra.mxu0 0.0
      %274 = vmatpush.xpose.msra.mxu0 0.0
      %275 = vmatpush.xpose.msra.mxu0 0.0
      %276 = vmatpush.xpose.msra.mxu0 0.0
      %277 = vmatpush.xpose.msra.mxu0 %v260
      %278 = vmatmul.f32.gmra.mxu0 %v258
      %v279 = vpop.f32.mrf.mxu0
      %v280 = vadd.f32 0.0, %v279
      %281 = vdwg.mxu0
      %v282 = vsel %vm190, %v280, -inf
      %283 = vmax.xlane.f32.xlu0 %v282
      %v284 = vpop.xlane.xlu0 %283
      %v285 = vsub.f32 %v280, %v284
      %v286 = vmul.f32 %v285, 1.442695
      %v287 = vpow.pop %v286
      %v288 = vsel %vm190, %v287, 0.0
      %289 = vadd.xlane.f32.xlu0 %v288
      %v290 = vpop.xlane.xlu0 %289
      %291 = vrot.lane.b32.xlu0 %v189, 88
      %v292 = vpop.permute.xlu0 %291
      %v295 = vsel %vm190, %v287, 0
      %297 = vmatpush.msra.mxu0 0.0
      %298 = vmatpush.msra.mxu0 0.0
      %299 = vmatpush.msra.mxu0 0.0
      %300 = vmatpush.msra.mxu0 0.0
      %301 = vmatpush.msra.mxu0 0.0
      %302 = vmatpush.msra.mxu0 0.0
      %303 = vmatpush.msra.mxu0 0.0
      %304 = vmatpush.msra.mxu0 0.0
      %305 = vmatpush.msra.mxu0 0.0
      %306 = vmatpush.msra.mxu0 0.0
      %307 = vmatpush.msra.mxu0 0.0
      %308 = vmatpush.msra.mxu0 0.0
      %309 = vmatpush.msra.mxu0 0.0
      %310 = vmatpush.msra.mxu0 0.0
      %311 = vmatpush.msra.mxu0 0.0
      %312 = vmatpush.msra.mxu0 %v292
      %313 = vmatmul.f32.gmra.mxu0 %v295
      %v314 = vpop.f32.mrf.mxu0
      %v315 = vadd.f32 0.0, %v314
      %316 = vdwg.mxu0
      %v317 = vrcp.pop %v290
      %v318 = vmul.f32 %v315, %v317
      %319 = vrot.lane.b32.xlu0 %v188, 112
      %v320 = vpop.permute.xlu0 %319
      %321 = vrot.lane.b32.xlu0 %v189, 112
      %v322 = vpop.permute.xlu0 %321
      %v323 = vsel %vm190, %v320, 0
      %v325 = vsel %vm190, %v322, 0
      %327 = vmatpush.xpose.msra.mxu0 0.0
      %328 = vmatpush.xpose.msra.mxu0 0.0
      %329 = vmatpush.xpose.msra.mxu0 0.0
      %330 = vmatpush.xpose.msra.mxu0 0.0
      %331 = vmatpush.xpose.msra.mxu0 0.0
      %332 = vmatpush.xpose.msra.mxu0 0.0
      %333 = vmatpush.xpose.msra.mxu0 0.0
      %334 = vmatpush.xpose.msra.mxu0 0.0
      %335 = vmatpush.xpose.msra.mxu0 0.0
      %336 = vmatpush.xpose.msra.mxu0 0.0
      %337 = vmatpush.xpose.msra.mxu0 0.0
      %338 = vmatpush.xpose.msra.mxu0 0.0
      %339 = vmatpush.xpose.msra.mxu0 0.0
      %340 = vmatpush.xpose.msra.mxu0 0.0
      %341 = vmatpush.xpose.msra.mxu0 0.0
      %342 = vmatpush.xpose.msra.mxu0 %v325
      %343 = vmatmul.f32.gmra.mxu0 %v323
      %v344 = vpop.f32.mrf.mxu0
      %v345 = vadd.f32 0.0, %v344
      %346 = vdwg.mxu0
      %v347 = vsel %vm190, %v345, -inf
      %348 = vmax.xlane.f32.xlu0 %v347
      %v349 = vpop.xlane.xlu0 %348
      %v350 = vsub.f32 %v345, %v349
      %v351 = vmul.f32 %v350, 1.442695
      %v352 = vpow.pop %v351
      %v353 = vsel %vm190, %v352, 0.0
      %354 = vadd.xlane.f32.xlu0 %v353
      %v355 = vpop.xlane.xlu0 %354
      %356 = vrot.lane.b32.xlu0 %v189, 80
      %v357 = vpop.permute.xlu0 %356
      %v360 = vsel %vm190, %v352, 0
      %362 = vmatpush.msra.mxu0 0.0
      %363 = vmatpush.msra.mxu0 0.0
      %364 = vmatpush.msra.mxu0 0.0
      %365 = vmatpush.msra.mxu0 0.0
      %366 = vmatpush.msra.mxu0 0.0
      %367 = vmatpush.msra.mxu0 0.0
      %368 = vmatpush.msra.mxu0 0.0
      %369 = vmatpush.msra.mxu0 0.0
      %370 = vmatpush.msra.mxu0 0.0
      %371 = vmatpush.msra.mxu0 0.0
      %372 = vmatpush.msra.mxu0 0.0
      %373 = vmatpush.msra.mxu0 0.0
      %374 = vmatpush.msra.mxu0 0.0
      %375 = vmatpush.msra.mxu0 0.0
      %376 = vmatpush.msra.mxu0 0.0
      %377 = vmatpush.msra.mxu0 %v357
      %378 = vmatmul.f32.gmra.mxu0 %v360
      %v379 = vpop.f32.mrf.mxu0
      %v380 = vadd.f32 0.0, %v379
      %381 = vdwg.mxu0
      %v382 = vrcp.pop %v355
      %v383 = vmul.f32 %v380, %v382
      %384 = vrot.lane.b32.xlu0 %v188, 104
      %v385 = vpop.permute.xlu0 %384
      %386 = vrot.lane.b32.xlu0 %v189, 104
      %v387 = vpop.permute.xlu0 %386
      %v388 = vsel %vm190, %v385, 0
      %v390 = vsel %vm190, %v387, 0
      %392 = vmatpush.xpose.msra.mxu0 0.0
      %393 = vmatpush.xpose.msra.mxu0 0.0
      %394 = vmatpush.xpose.msra.mxu0 0.0
      %395 = vmatpush.xpose.msra.mxu0 0.0
      %396 = vmatpush.xpose.msra.mxu0 0.0
      %397 = vmatpush.xpose.msra.mxu0 0.0
      %398 = vmatpush.xpose.msra.mxu0 0.0
      %399 = vmatpush.xpose.msra.mxu0 0.0
      %400 = vmatpush.xpose.msra.mxu0 0.0
      %401 = vmatpush.xpose.msra.mxu0 0.0
      %402 = vmatpush.xpose.msra.mxu0 0.0
      %403 = vmatpush.xpose.msra.mxu0 0.0
      %404 = vmatpush.xpose.msra.mxu0 0.0
      %405 = vmatpush.xpose.msra.mxu0 0.0
      %406 = vmatpush.xpose.msra.mxu0 0.0
      %407 = vmatpush.xpose.msra.mxu0 %v390
      %408 = vmatmul.f32.gmra.mxu0 %v388
      %v409 = vpop.f32.mrf.mxu0
      %v410 = vadd.f32 0.0, %v409
      %411 = vdwg.mxu0
      %v412 = vsel %vm190, %v410, -inf
      %413 = vmax.xlane.f32.xlu0 %v412
      %v414 = vpop.xlane.xlu0 %413
      %v415 = vsub.f32 %v410, %v414
      %v416 = vmul.f32 %v415, 1.442695
      %v417 = vpow.pop %v416
      %v418 = vsel %vm190, %v417, 0.0
      %419 = vadd.xlane.f32.xlu0 %v418
      %v420 = vpop.xlane.xlu0 %419
      %421 = vrot.lane.b32.xlu0 %v189, 72
      %v422 = vpop.permute.xlu0 %421
      %v425 = vsel %vm190, %v417, 0
      %427 = vmatpush.msra.mxu0 0.0
      %428 = vmatpush.msra.mxu0 0.0
      %429 = vmatpush.msra.mxu0 0.0
      %430 = vmatpush.msra.mxu0 0.0
      %431 = vmatpush.msra.mxu0 0.0
      %432 = vmatpush.msra.mxu0 0.0
      %433 = vmatpush.msra.mxu0 0.0
      %434 = vmatpush.msra.mxu0 0.0
      %435 = vmatpush.msra.mxu0 0.0
      %436 = vmatpush.msra.mxu0 0.0
      %437 = vmatpush.msra.mxu0 0.0
      %438 = vmatpush.msra.mxu0 0.0
      %439 = vmatpush.msra.mxu0 0.0
      %440 = vmatpush.msra.mxu0 0.0
      %441 = vmatpush.msra.mxu0 0.0
      %442 = vmatpush.msra.mxu0 %v422
      %443 = vmatmul.f32.gmra.mxu0 %v425
      %v444 = vpop.f32.mrf.mxu0
      %v445 = vadd.f32 0.0, %v444
      %446 = vdwg.mxu0
      %v447 = vrcp.pop %v420
      %v448 = vmul.f32 %v445, %v447
      %450 = vrot.lane.b32.xlu0 %v318, 8
      %v451 = vpop.permute.xlu0 %450
      %454 = vrot.lane.b32.xlu0 %v383, 16
      %v455 = vpop.permute.xlu0 %454
      %458 = vrot.lane.b32.xlu0 %v448, 24
      %v459 = vpop.permute.xlu0 %458
      %v461 = vsel %vm190, %v253, %v451
      %vm462 = vcmask 130048
      %v463 = vsel %vm462, %v461, %v455
      %vm464 = vcmask 195584
      %v465 = vsel %vm464, %v463, %v459
      %vm466 = vcmask 261120
      %467 = vst.msk [vmem:[%s186] sm:$0xff] %vm466, %v465
      %p468 = scmp.lt.s32.totalorder %s17, 1
      %s469 = scalar_select %p468, %s17, 1
      %p470 = scmp.lt.s32.totalorder %s18, 0
      %s471 = scalar_select %p470, %s18, 0
      %s472 = sadd.s32 %s471, %s469
      %s473 = smul.addr %s472, 8
      %s474 = scalar_lea.vmem %s2, %s473
      // Predicated region
      $region29: #{llama_forward.42} parent=27 // pred_check
        %p475 = pneg %p99
      $region30: #{llama_forward.42} parent=27 // pred_check_branch
        %477 = sbr.rel (%p475) target = $region32
      $region31: #{llama_forward.42} parent=27 // pred_region
        _
      $region32: #{llama_forward.42} parent=27 // pred_fallthru
        _
    $region28: #{llama_forward.42} parent=5 // pred_fallthru
      _
    %p478 = scmp.le.s32.totalorder 2, %s8
    // Predicated region
    $region33: #{llama_forward.42} parent=5 // pred_check
      %p479 = pneg %p478
    $region34: #{llama_forward.42} parent=5 // pred_check_branch
      %481 = sbr.rel (%p479) target = $region36
    $region35: #{llama_forward.42} parent=5 // pred_region
      %s482 = ssub.s32 %s8, 2
      // Predicated region
      $region37: #{llama_forward.42} parent=35 // pred_check
        %p483 = pneg %p105
      $region38: #{llama_forward.42} parent=35 // pred_check_branch
        %485 = sbr.rel (%p483) target = $region40
      $region39: #{llama_forward.42} parent=35 // pred_region
        %p486 = scmp.lt.s32.totalorder %s19, 1
        %s487 = scalar_select %p486, %s19, 1
        %p488 = scmp.lt.s32.totalorder %s20, 0
        %s489 = scalar_select %p488, %s20, 0
        %s490 = sadd.s32 %s489, %s487
        %s491 = smul.addr %s490, 8
        %s492 = scalar_lea.vmem %s2, %s491
      $region40: #{llama_forward.42} parent=35 // pred_fallthru
        _
    $region36: #{llama_forward.42} parent=5 // pred_fallthru
      _
  $region6: #{llama_forward.42} parent=0 // loop_footer
    %s12 = sadd.s32 1, %s8
  $region7: #{llama_forward.42} parent=0 // loop_footer_branch
    %7 = sbr.rel target = $region3
  $region8: #{llama_forward.42} parent=0 // loop_exit
    _

// kernel: llama_forward.46
$region0: #{llama_forward.46}
  #allocation0 [shape = 'u32[]', space=smem, size = 0x4, offset = 0x4, fixed_abs, tag = 'smem constant byte address 0x4 - core index']
  #allocation1 [shape = 'u32[72,128]{1,0:T(1,128)}', space=vmem, size = 0x9000, scoped, tag = 'internal scratch']
  #allocation2 [shape = 'f32[16,32]{1,0:T(8,128)}', space=vmem, size = 0x2000, scoped, tag = 'scratch operand']
  %s0 = inlined_call_operand.vmem [shape: f32[16,64], index: 0, kind: input, shape index: {}]
  %s1 = inlined_call_operand.vmem [shape: f32[64,32], index: 1, kind: input, shape index: {}]
  %s2 = inlined_call_operand.vmem [shape: f32[1,32], index: 2, kind: input, shape index: {}]
  %s3 = inlined_call_operand.vmem [shape: f32[16,32], index: 3, kind: output, shape index: {}]
  %s4 = sld [smem:[#allocation0]]
  $region30: #{llama_forward.46} parent=0
    _
  %s6 = ssub.s32 1, %s4
  %s7 = scalar_select 0, %s6, %s4
  // Predicated region
  $region2: #{llama_forward.46} parent=0 // pred_check
    _
  $region3: #{llama_forward.46} parent=0 // pred_check_branch
    %9 = sbr.rel (0) target = $region5
  $region4: #{llama_forward.46} parent=0 // pred_region
    _
  $region5: #{llama_forward.46} parent=0 // pred_fallthru
    _
  // Predicated region
  $region6: #{llama_forward.46} parent=0 // pred_check
    _
  $region7: #{llama_forward.46} parent=0 // pred_check_branch
    %11 = sbr.rel (0) target = $region9
  $region8: #{llama_forward.46} parent=0 // pred_region
    _
  $region9: #{llama_forward.46} parent=0 // pred_fallthru
    _
  // Predicated region
  $region10: #{llama_forward.46} parent=0 // pred_check
    _
  $region11: #{llama_forward.46} parent=0 // pred_check_branch
    %13 = sbr.rel (0) target = $region13
  $region12: #{llama_forward.46} parent=0 // pred_region
    _
  $region13: #{llama_forward.46} parent=0 // pred_fallthru
    _
  %p14 = scmp.eq.s32.totalorder 0, 0
  // Predicated region
  $region14: #{llama_forward.46} parent=0 // pred_check
    %p15 = pneg %p14
  $region15: #{llama_forward.46} parent=0 // pred_check_branch
    %17 = sbr.rel (%p15) target = $region17
  $region16: #{llama_forward.46} parent=0 // pred_region
    %vm18 = vcmask 261120
    %19 = vst.msk [vmem:[#allocation2] sm:$0xff] %vm18, 0.0
    %20 = vst.msk [vmem:[#allocation2 + $0x8] sm:$0xff] %vm18, 0.0
  $region17: #{llama_forward.46} parent=0 // pred_fallthru
    _
  %v21 = vld [vmem:[#allocation2] sm:$0xff]
  %v22 = vld [vmem:[#allocation2 + $0x8] sm:$0xff]
  %v23 = vld [vmem:[%s0] sm:$0xff]
  %v24 = vld [vmem:[%s0 + $0x8] sm:$0xff]
  %v25 = vld [vmem:[%s1] sm:$0xff]
  %v26 = vld [vmem:[%s1 + $0x8] sm:$0xff]
  %v27 = vld [vmem:[%s1 + $0x10] sm:$0xff]
  %v28 = vld [vmem:[%s1 + $0x18] sm:$0xff]
  %v29 = vld [vmem:[%s1 + $0x20] sm:$0xff]
  %v30 = vld [vmem:[%s1 + $0x28] sm:$0xff]
  %v31 = vld [vmem:[%s1 + $0x30] sm:$0xff]
  %v32 = vld [vmem:[%s1 + $0x38] sm:$0xff]
  %vm33 = vcmask 523264
  %v35 = vsel %vm33, %v23, 0
  %v38 = vsel %vm33, %v24, 0
  %40 = vmatpush.msra.mxu0 0.0
  %41 = vmatpush.msra.mxu0 0.0
  %42 = vmatpush.msra.mxu0 0.0
  %43 = vmatpush.msra.mxu0 0.0
  %44 = vmatpush.msra.mxu0 0.0
  %45 = vmatpush.msra.mxu0 0.0
  %46 = vmatpush.msra.mxu0 0.0
  %47 = vmatpush.msra.mxu0 0.0
  %48 = vmatpush.msra.mxu0 %v32
  %49 = vmatpush.msra.mxu0 %v31
  %50 = vmatpush.msra.mxu0 %v30
  %51 = vmatpush.msra.mxu0 %v29
  %52 = vmatpush.msra.mxu0 %v28
  %53 = vmatpush.msra.mxu0 %v27
  %54 = vmatpush.msra.mxu0 %v26
  %55 = vmatpush.msra.mxu0 %v25
  %56 = vmatmul.f32.gmra.mxu0 %v35
  %v57 = vpop.f32.mrf.mxu0
  %v58 = vadd.f32 0.0, %v57
  %59 = vmatmul.f32.gmra.mxu0 %v38
  %v60 = vpop.f32.mrf.mxu0
  %v61 = vadd.f32 0.0, %v60
  %62 = vdwg.mxu0
  %v63 = vadd.f32 %v21, %v58
  %v64 = vadd.f32 %v22, %v61
  %vm65 = vcmask 261120
  %66 = vst.msk [vmem:[#allocation2] sm:$0xff] %vm65, %v63
  %67 = vst.msk [vmem:[#allocation2 + $0x8] sm:$0xff] %vm65, %v64
  // Predicated region
  $region18: #{llama_forward.46} parent=0 // pred_check
    %p68 = pneg %p14
  $region19: #{llama_forward.46} parent=0 // pred_check_branch
    %70 = sbr.rel (%p68) target = $region21
  $region20: #{llama_forward.46} parent=0 // pred_region
    %v71 = vld [vmem:[#allocation2] sm:$0xff]
    %v72 = vld [vmem:[#allocation2 + $0x8] sm:$0xff]
    %v73 = vld [vmem:[%s2] sm:$0x1]
    %v75 = vperm.slane %v73, 0
    %v77 = vadd.f32 %v71, %v75
    %v78 = vadd.f32 %v72, %v75
    %79 = vst.msk [vmem:[%s3] sm:$0xff] %vm65, %v77
    %80 = vst.msk [vmem:[%s3 + $0x8] sm:$0xff] %vm65, %v78
  $region21: #{llama_forward.46} parent=0 // pred_fallthru
    _
  // Predicated region
  $region22: #{llama_forward.46} parent=0 // pred_check
    _
  $region23: #{llama_forward.46} parent=0 // pred_check_branch
    %82 = sbr.rel (0) target = $region25
  $region24: #{llama_forward.46} parent=0 // pred_region
    _
  $region25: #{llama_forward.46} parent=0 // pred_fallthru
    _
  // Predicated region
  $region26: #{llama_forward.46} parent=0 // pred_check
    _
  $region27: #{llama_forward.46} parent=0 // pred_check_branch
    %84 = sbr.rel (0) target = $region29
  $region28: #{llama_forward.46} parent=0 // pred_region
    _
  $region29: #{llama_forward.46} parent=0 // pred_fallthru
    _

// kernel: llama_forward.45
$region0: #{llama_forward.45}
  #allocation0 [shape = 'u32[]', space=smem, size = 0x4, offset = 0x4, fixed_abs, tag = 'smem constant byte address 0x4 - core index']
  #allocation1 [shape = 'u32[72,128]{1,0:T(1,128)}', space=vmem, size = 0x9000, scoped, tag = 'internal scratch']
  #allocation2 [shape = 'f32[16,64]{1,0:T(8,128)}', space=vmem, size = 0x2000, scoped, tag = 'scratch operand']
  %s0 = inlined_call_operand.vmem [shape: f32[16,32], index: 0, kind: input, shape index: {}]
  %s1 = inlined_call_operand.vmem [shape: f32[32,64], index: 1, kind: input, shape index: {}]
  %s2 = inlined_call_operand.vmem [shape: f32[1,64], index: 2, kind: input, shape index: {}]
  %s3 = inlined_call_operand.vmem [shape: f32[16,64], index: 3, kind: output, shape index: {}]
  %s4 = sld [smem:[#allocation0]]
  $region30: #{llama_forward.45} parent=0
    _
  %s6 = ssub.s32 1, %s4
  %s7 = scalar_select 0, %s6, %s4
  // Predicated region
  $region2: #{llama_forward.45} parent=0 // pred_check
    _
  $region3: #{llama_forward.45} parent=0 // pred_check_branch
    %9 = sbr.rel (0) target = $region5
  $region4: #{llama_forward.45} parent=0 // pred_region
    _
  $region5: #{llama_forward.45} parent=0 // pred_fallthru
    _
  // Predicated region
  $region6: #{llama_forward.45} parent=0 // pred_check
    _
  $region7: #{llama_forward.45} parent=0 // pred_check_branch
    %11 = sbr.rel (0) target = $region9
  $region8: #{llama_forward.45} parent=0 // pred_region
    _
  $region9: #{llama_forward.45} parent=0 // pred_fallthru
    _
  // Predicated region
  $region10: #{llama_forward.45} parent=0 // pred_check
    _
  $region11: #{llama_forward.45} parent=0 // pred_check_branch
    %13 = sbr.rel (0) target = $region13
  $region12: #{llama_forward.45} parent=0 // pred_region
    _
  $region13: #{llama_forward.45} parent=0 // pred_fallthru
    _
  %p14 = scmp.eq.s32.totalorder 0, 0
  // Predicated region
  $region14: #{llama_forward.45} parent=0 // pred_check
    %p15 = pneg %p14
  $region15: #{llama_forward.45} parent=0 // pred_check_branch
    %17 = sbr.rel (%p15) target = $region17
  $region16: #{llama_forward.45} parent=0 // pred_region
    %vm18 = vcmask 523264
    %19 = vst.msk [vmem:[#allocation2] sm:$0xff] %vm18, 0.0
    %20 = vst.msk [vmem:[#allocation2 + $0x8] sm:$0xff] %vm18, 0.0
  $region17: #{llama_forward.45} parent=0 // pred_fallthru
    _
  %v21 = vld [vmem:[#allocation2] sm:$0xff]
  %v22 = vld [vmem:[#allocation2 + $0x8] sm:$0xff]
  %v23 = vld [vmem:[%s0] sm:$0xff]
  %v24 = vld [vmem:[%s0 + $0x8] sm:$0xff]
  %v25 = vld [vmem:[%s1] sm:$0xff]
  %v26 = vld [vmem:[%s1 + $0x8] sm:$0xff]
  %v27 = vld [vmem:[%s1 + $0x10] sm:$0xff]
  %v28 = vld [vmem:[%s1 + $0x18] sm:$0xff]
  %vm29 = vcmask 261120
  %v31 = vsel %vm29, %v23, 0
  %v34 = vsel %vm29, %v24, 0
  %36 = vmatpush.msra.mxu0 0.0
  %37 = vmatpush.msra.mxu0 0.0
  %38 = vmatpush.msra.mxu0 0.0
  %39 = vmatpush.msra.mxu0 0.0
  %40 = vmatpush.msra.mxu0 0.0
  %41 = vmatpush.msra.mxu0 0.0
  %42 = vmatpush.msra.mxu0 0.0
  %43 = vmatpush.msra.mxu0 0.0
  %44 = vmatpush.msra.mxu0 0.0
  %45 = vmatpush.msra.mxu0 0.0
  %46 = vmatpush.msra.mxu0 0.0
  %47 = vmatpush.msra.mxu0 0.0
  %48 = vmatpush.msra.mxu0 %v28
  %49 = vmatpush.msra.mxu0 %v27
  %50 = vmatpush.msra.mxu0 %v26
  %51 = vmatpush.msra.mxu0 %v25
  %52 = vmatmul.f32.gmra.mxu0 %v31
  %v53 = vpop.f32.mrf.mxu0
  %v54 = vadd.f32 0.0, %v53
  %55 = vmatmul.f32.gmra.mxu0 %v34
  %v56 = vpop.f32.mrf.mxu0
  %v57 = vadd.f32 0.0, %v56
  %58 = vdwg.mxu0
  %v59 = vadd.f32 %v21, %v54
  %v60 = vadd.f32 %v22, %v57
  %vm61 = vcmask 523264
  %62 = vst.msk [vmem:[#allocation2] sm:$0xff] %vm61, %v59
  %63 = vst.msk [vmem:[#allocation2 + $0x8] sm:$0xff] %vm61, %v60
  // Predicated region
  $region18: #{llama_forward.45} parent=0 // pred_check
    %p64 = pneg %p14
  $region19: #{llama_forward.45} parent=0 // pred_check_branch
    %66 = sbr.rel (%p64) target = $region21
  $region20: #{llama_forward.45} parent=0 // pred_region
    %v67 = vld [vmem:[#allocation2] sm:$0xff]
    %v68 = vld [vmem:[#allocation2 + $0x8] sm:$0xff]
    %v69 = vld [vmem:[%s2] sm:$0x1]
    %v71 = vperm.slane %v69, 0
    %v73 = vadd.f32 %v67, %v71
    %v74 = vadd.f32 %v68, %v71
    %v75 = vmax.f32 %v73, 0.0
    %v76 = vmax.f32 %v74, 0.0
    %77 = vst.msk [vmem:[%s3] sm:$0xff] %vm61, %v75
    %78 = vst.msk [vmem:[%s3 + $0x8] sm:$0xff] %vm61, %v76
  $region21: #{llama_forward.45} parent=0 // pred_fallthru
    _
  // Predicated region
  $region22: #{llama_forward.45} parent=0 // pred_check
    _
  $region23: #{llama_forward.45} parent=0 // pred_check_branch
    %80 = sbr.rel (0) target = $region25
  $region24: #{llama_forward.45} parent=0 // pred_region
    _
  $region25: #{llama_forward.45} parent=0 // pred_fallthru
    _
  // Predicated region
  $region26: #{llama_forward.45} parent=0 // pred_check
    _
  $region27: #{llama_forward.45} parent=0 // pred_check_branch
    %82 = sbr.rel (0) target = $region29
  $region28: #{llama_forward.45} parent=0 // pred_region
    _
  $region29: #{llama_forward.45} parent=0 // pred_fallthru
    _

// kernel: llama_forward.55
$region0: #{llama_forward.55}
  #allocation0 [shape = 'u32[]', space=smem, size = 0x4, offset = 0x4, fixed_abs, tag = 'smem constant byte address 0x4 - core index']
  #allocation1 [shape = 'u32[72,128]{1,0:T(1,128)}', space=vmem, size = 0x9000, scoped, tag = 'internal scratch']
  %s0 = inlined_call_operand.vmem [shape: f32[16,32], index: 0, kind: input, shape index: {}]
  %s1 = inlined_call_operand.vmem [shape: f32[1,32], index: 1, kind: input, shape index: {}]
  %s2 = inlined_call_operand.vmem [shape: f32[1,32], index: 2, kind: input, shape index: {}]
  %s3 = inlined_call_operand.vmem [shape: f32[16,32], index: 3, kind: output, shape index: {}]
  %s4 = sld [smem:[#allocation0]]
  $region22: #{llama_forward.55} parent=0
    _
  %s6 = ssub.s32 1, %s4
  %s7 = scalar_select 0, %s6, %s4
  // Predicated region
  $region2: #{llama_forward.55} parent=0 // pred_check
    _
  $region3: #{llama_forward.55} parent=0 // pred_check_branch
    %9 = sbr.rel (0) target = $region5
  $region4: #{llama_forward.55} parent=0 // pred_region
    _
  $region5: #{llama_forward.55} parent=0 // pred_fallthru
    _
  // Predicated region
  $region6: #{llama_forward.55} parent=0 // pred_check
    _
  $region7: #{llama_forward.55} parent=0 // pred_check_branch
    %11 = sbr.rel (0) target = $region9
  $region8: #{llama_forward.55} parent=0 // pred_region
    _
  $region9: #{llama_forward.55} parent=0 // pred_fallthru
    _
  // Predicated region
  $region10: #{llama_forward.55} parent=0 // pred_check
    _
  $region11: #{llama_forward.55} parent=0 // pred_check_branch
    %13 = sbr.rel (0) target = $region13
  $region12: #{llama_forward.55} parent=0 // pred_region
    _
  $region13: #{llama_forward.55} parent=0 // pred_fallthru
    _
  %v14 = vld [vmem:[%s0] sm:$0xff]
  %v15 = vld [vmem:[%s0 + $0x8] sm:$0xff]
  %vm16 = vcmask 261120
  %v17 = vsel %vm16, %v14, 0.0
  %18 = vadd.xlane.f32.xlu0 %v17
  %v19 = vpop.xlane.xlu0 %18
  %v20 = vsel %vm16, %v15, 0.0
  %21 = vadd.xlane.f32.xlu0 %v20
  %v22 = vpop.xlane.xlu0 %21
  %v23 = vrcp.pop 32.0
  %v24 = vmul.f32 32.0, %v23
  %v25 = vsub.f32 1.0, %v24
  %v26 = vmul.f32 %v23, %v25
  %v27 = vadd.f32 %v23, %v26
  %vm28 = vweird.f32 %v23
  %v29 = vsel %vm28, %v23, %v27
  %v30 = vmul.f32 %v19, %v29
  %v31 = vmul.f32 %v22, %v29
  %v32 = vsub.f32 %v14, %v30
  %v33 = vsub.f32 %v15, %v31
  %v34 = vmul.f32 %v32, %v32
  %v35 = vmul.f32 %v33, %v33
  %v36 = vsel %vm16, %v34, 0.0
  %37 = vadd.xlane.f32.xlu0 %v36
  %v38 = vpop.xlane.xlu0 %37
  %v39 = vsel %vm16, %v35, 0.0
  %40 = vadd.xlane.f32.xlu0 %v39
  %v41 = vpop.xlane.xlu0 %40
  %v42 = vmul.f32 %v38, %v29
  %v43 = vmul.f32 %v41, %v29
  %v44 = vadd.f32 %v42, 1e-05
  %v45 = vadd.f32 %v43, 1e-05
  %v46 = vrsqrt.pop %v44
  %v47 = vmul.f32 %v46, %v44
  %v48 = vmul.f32 %v47, %v46
  %v49 = vmul.f32 0.5, %v48
  %v50 = vsub.f32 1.5, %v49
  %v51 = vmul.f32 %v46, %v50
  %vm52 = vweird.f32 %v44
  %vm53 = vweird.f32 %v46
  %vm54 = vmor %vm52, %vm53
  %v55 = vsel %vm54, %v46, %v51
  %v56 = vrsqrt.pop %v45
  %v57 = vmul.f32 %v56, %v45
  %v58 = vmul.f32 %v57, %v56
  %v59 = vmul.f32 0.5, %v58
  %v60 = vsub.f32 1.5, %v59
  %v61 = vmul.f32 %v56, %v60
  %vm62 = vweird.f32 %v45
  %vm63 = vweird.f32 %v56
  %vm64 = vmor %vm62, %vm63
  %v65 = vsel %vm64, %v56, %v61
  %v66 = vmul.f32 %v32, %v55
  %v67 = vmul.f32 %v33, %v65
  %v68 = vld [vmem:[%s1] sm:$0x1]
  %v70 = vperm.slane %v68, 0
  %v72 = vmul.f32 %v66, %v70
  %v73 = vmul.f32 %v67, %v70
  %v74 = vld [vmem:[%s2] sm:$0x1]
  %v76 = vperm.slane %v74, 0
  %v78 = vadd.f32 %v72, %v76
  %v79 = vadd.f32 %v73, %v76
  %80 = vst.msk [vmem:[%s3] sm:$0xff] %vm16, %v78
  %81 = vst.msk [vmem:[%s3 + $0x8] sm:$0xff] %vm16, %v79
  // Predicated region
  $region14: #{llama_forward.55} parent=0 // pred_check
    _
  $region15: #{llama_forward.55} parent=0 // pred_check_branch
    %83 = sbr.rel (0) target = $region17
  $region16: #{llama_forward.55} parent=0 // pred_region
    _
  $region17: #{llama_forward.55} parent=0 // pred_fallthru
    _
  // Predicated region
  $region18: #{llama_forward.55} parent=0 // pred_check
    _
  $region19: #{llama_forward.55} parent=0 // pred_check_branch
    %85 = sbr.rel (0) target = $region21
  $region20: #{llama_forward.55} parent=0 // pred_region
    _
  $region21: #{llama_forward.55} parent=0 // pred_fallthru
    _

// kernel: llama_forward.61
$region0: #{llama_forward.61}
  #allocation0 [shape = 'u32[]', space=smem, size = 0x4, offset = 0x4, fixed_abs, tag = 'smem constant byte address 0x4 - core index']
  #allocation1 [shape = 'u32[72,128]{1,0:T(1,128)}', space=vmem, size = 0x9000, scoped, tag = 'internal scratch']
  #allocation2 [shape = 'f32[16,64]{1,0:T(8,128)}', space=vmem, size = 0x2000, scoped, tag = 'scratch operand']
  %s0 = inlined_call_operand.vmem [shape: f32[16,32], index: 0, kind: input, shape index: {}]
  %s1 = inlined_call_operand.vmem [shape: f32[32,64], index: 1, kind: input, shape index: {}]
  %s2 = inlined_call_operand.vmem [shape: f32[1,64], index: 2, kind: input, shape index: {}]
  %s3 = inlined_call_operand.vmem [shape: f32[16,64], index: 3, kind: output, shape index: {}]
  %s4 = sld [smem:[#allocation0]]
  $region30: #{llama_forward.61} parent=0
    _
  %s6 = ssub.s32 1, %s4
  %s7 = scalar_select 0, %s6, %s4
  // Predicated region
  $region2: #{llama_forward.61} parent=0 // pred_check
    _
  $region3: #{llama_forward.61} parent=0 // pred_check_branch
    %9 = sbr.rel (0) target = $region5
  $region4: #{llama_forward.61} parent=0 // pred_region
    _
  $region5: #{llama_forward.61} parent=0 // pred_fallthru
    _
  // Predicated region
  $region6: #{llama_forward.61} parent=0 // pred_check
    _
  $region7: #{llama_forward.61} parent=0 // pred_check_branch
    %11 = sbr.rel (0) target = $region9
  $region8: #{llama_forward.61} parent=0 // pred_region
    _
  $region9: #{llama_forward.61} parent=0 // pred_fallthru
    _
  // Predicated region
  $region10: #{llama_forward.61} parent=0 // pred_check
    _
  $region11: #{llama_forward.61} parent=0 // pred_check_branch
    %13 = sbr.rel (0) target = $region13
  $region12: #{llama_forward.61} parent=0 // pred_region
    _
  $region13: #{llama_forward.61} parent=0 // pred_fallthru
    _
  %p14 = scmp.eq.s32.totalorder 0, 0
  // Predicated region
  $region14: #{llama_forward.61} parent=0 // pred_check
    %p15 = pneg %p14
  $region15: #{llama_forward.61} parent=0 // pred_check_branch
    %17 = sbr.rel (%p15) target = $region17
  $region16: #{llama_forward.61} parent=0 // pred_region
    %vm18 = vcmask 523264
    %19 = vst.msk [vmem:[#allocation2] sm:$0xff] %vm18, 0.0
    %20 = vst.msk [vmem:[#allocation2 + $0x8] sm:$0xff] %vm18, 0.0
  $region17: #{llama_forward.61} parent=0 // pred_fallthru
    _
  %v21 = vld [vmem:[#allocation2] sm:$0xff]
  %v22 = vld [vmem:[#allocation2 + $0x8] sm:$0xff]
  %v23 = vld [vmem:[%s0] sm:$0xff]
  %v24 = vld [vmem:[%s0 + $0x8] sm:$0xff]
  %v25 = vld [vmem:[%s1] sm:$0xff]
  %v26 = vld [vmem:[%s1 + $0x8] sm:$0xff]
  %v27 = vld [vmem:[%s1 + $0x10] sm:$0xff]
  %v28 = vld [vmem:[%s1 + $0x18] sm:$0xff]
  %vm29 = vcmask 261120
  %v31 = vsel %vm29, %v23, 0
  %v34 = vsel %vm29, %v24, 0
  %36 = vmatpush.msra.mxu0 0.0
  %37 = vmatpush.msra.mxu0 0.0
  %38 = vmatpush.msra.mxu0 0.0
  %39 = vmatpush.msra.mxu0 0.0
  %40 = vmatpush.msra.mxu0 0.0
  %41 = vmatpush.msra.mxu0 0.0
  %42 = vmatpush.msra.mxu0 0.0
  %43 = vmatpush.msra.mxu0 0.0
  %44 = vmatpush.msra.mxu0 0.0
  %45 = vmatpush.msra.mxu0 0.0
  %46 = vmatpush.msra.mxu0 0.0
  %47 = vmatpush.msra.mxu0 0.0
  %48 = vmatpush.msra.mxu0 %v28
  %49 = vmatpush.msra.mxu0 %v27
  %50 = vmatpush.msra.mxu0 %v26
  %51 = vmatpush.msra.mxu0 %v25
  %52 = vmatmul.f32.gmra.mxu0 %v31
  %v53 = vpop.f32.mrf.mxu0
  %v54 = vadd.f32 0.0, %v53
  %55 = vmatmul.f32.gmra.mxu0 %v34
  %v56 = vpop.f32.mrf.mxu0
  %v57 = vadd.f32 0.0, %v56
  %58 = vdwg.mxu0
  %v59 = vadd.f32 %v21, %v54
  %v60 = vadd.f32 %v22, %v57
  %vm61 = vcmask 523264
  %62 = vst.msk [vmem:[#allocation2] sm:$0xff] %vm61, %v59
  %63 = vst.msk [vmem:[#allocation2 + $0x8] sm:$0xff] %vm61, %v60
  // Predicated region
  $region18: #{llama_forward.61} parent=0 // pred_check
    %p64 = pneg %p14
  $region19: #{llama_forward.61} parent=0 // pred_check_branch
    %66 = sbr.rel (%p64) target = $region21
  $region20: #{llama_forward.61} parent=0 // pred_region
    %v67 = vld [vmem:[#allocation2] sm:$0xff]
    %v68 = vld [vmem:[#allocation2 + $0x8] sm:$0xff]
    %v69 = vld [vmem:[%s2] sm:$0x1]
    %v71 = vperm.slane %v69, 0
    %v73 = vadd.f32 %v67, %v71
    %v74 = vadd.f32 %v68, %v71
    %75 = vst.msk [vmem:[%s3] sm:$0xff] %vm61, %v73
    %76 = vst.msk [vmem:[%s3 + $0x8] sm:$0xff] %vm61, %v74
  $region21: #{llama_forward.61} parent=0 // pred_fallthru
    _
  // Predicated region
  $region22: #{llama_forward.61} parent=0 // pred_check
    _
  $region23: #{llama_forward.61} parent=0 // pred_check_branch
    %78 = sbr.rel (0) target = $region25
  $region24: #{llama_forward.61} parent=0 // pred_region
    _
  $region25: #{llama_forward.61} parent=0 // pred_fallthru
    _
  // Predicated region
  $region26: #{llama_forward.61} parent=0 // pred_check
    _
  $region27: #{llama_forward.61} parent=0 // pred_check_branch
    %80 = sbr.rel (0) target = $region29
  $region28: #{llama_forward.61} parent=0 // pred_region
    _
  $region29: #{llama_forward.61} parent=0 // pred_fallthru
    _

// kernel: llama_forward.81
$region0: #{llama_forward.81}
  #allocation0 [shape = 'u32[]', space=smem, size = 0x4, offset = 0x4, fixed_abs, tag = 'smem constant byte address 0x4 - core index']
  #allocation1 [shape = 'u32[72,128]{1,0:T(1,128)}', space=vmem, size = 0x9000, scoped, tag = 'internal scratch']
  #allocation2 [shape = 'f32[16,100]{1,0:T(8,128)}', space=vmem, size = 0x2000, scoped, tag = 'scratch operand']
  %s0 = inlined_call_operand.vmem [shape: f32[16,32], index: 0, kind: input, shape index: {}]
  %s1 = inlined_call_operand.vmem [shape: f32[32,100], index: 1, kind: input, shape index: {}]
  %s2 = inlined_call_operand.vmem [shape: f32[1,100], index: 2, kind: input, shape index: {}]
  %s3 = inlined_call_operand.vmem [shape: f32[16,100], index: 3, kind: output, shape index: {}]
  %s4 = sld [smem:[#allocation0]]
  $region30: #{llama_forward.81} parent=0
    _
  %s6 = ssub.s32 1, %s4
  %s7 = scalar_select 0, %s6, %s4
  // Predicated region
  $region2: #{llama_forward.81} parent=0 // pred_check
    _
  $region3: #{llama_forward.81} parent=0 // pred_check_branch
    %9 = sbr.rel (0) target = $region5
  $region4: #{llama_forward.81} parent=0 // pred_region
    _
  $region5: #{llama_forward.81} parent=0 // pred_fallthru
    _
  // Predicated region
  $region6: #{llama_forward.81} parent=0 // pred_check
    _
  $region7: #{llama_forward.81} parent=0 // pred_check_branch
    %11 = sbr.rel (0) target = $region9
  $region8: #{llama_forward.81} parent=0 // pred_region
    _
  $region9: #{llama_forward.81} parent=0 // pred_fallthru
    _
  // Predicated region
  $region10: #{llama_forward.81} parent=0 // pred_check
    _
  $region11: #{llama_forward.81} parent=0 // pred_check_branch
    %13 = sbr.rel (0) target = $region13
  $region12: #{llama_forward.81} parent=0 // pred_region
    _
  $region13: #{llama_forward.81} parent=0 // pred_fallthru
    _
  %p14 = scmp.eq.s32.totalorder 0, 0
  // Predicated region
  $region14: #{llama_forward.81} parent=0 // pred_check
    %p15 = pneg %p14
  $region15: #{llama_forward.81} parent=0 // pred_check_branch
    %17 = sbr.rel (%p15) target = $region17
  $region16: #{llama_forward.81} parent=0 // pred_region
    %vm18 = vcmask 818176
    %19 = vst.msk [vmem:[#allocation2] sm:$0xff] %vm18, 0.0
    %20 = vst.msk [vmem:[#allocation2 + $0x8] sm:$0xff] %vm18, 0.0
  $region17: #{llama_forward.81} parent=0 // pred_fallthru
    _
  %v21 = vld [vmem:[#allocation2] sm:$0xff]
  %v22 = vld [vmem:[#allocation2 + $0x8] sm:$0xff]
  %v23 = vld [vmem:[%s0] sm:$0xff]
  %v24 = vld [vmem:[%s0 + $0x8] sm:$0xff]
  %v25 = vld [vmem:[%s1] sm:$0xff]
  %v26 = vld [vmem:[%s1 + $0x8] sm:$0xff]
  %v27 = vld [vmem:[%s1 + $0x10] sm:$0xff]
  %v28 = vld [vmem:[%s1 + $0x18] sm:$0xff]
  %vm29 = vcmask 261120
  %v31 = vsel %vm29, %v23, 0
  %v34 = vsel %vm29, %v24, 0
  %36 = vmatpush.msra.mxu0 0.0
  %37 = vmatpush.msra.mxu0 0.0
  %38 = vmatpush.msra.mxu0 0.0
  %39 = vmatpush.msra.mxu0 0.0
  %40 = vmatpush.msra.mxu0 0.0
  %41 = vmatpush.msra.mxu0 0.0
  %42 = vmatpush.msra.mxu0 0.0
  %43 = vmatpush.msra.mxu0 0.0
  %44 = vmatpush.msra.mxu0 0.0
  %45 = vmatpush.msra.mxu0 0.0
  %46 = vmatpush.msra.mxu0 0.0
  %47 = vmatpush.msra.mxu0 0.0
  %48 = vmatpush.msra.mxu0 %v28
  %49 = vmatpush.msra.mxu0 %v27
  %50 = vmatpush.msra.mxu0 %v26
  %51 = vmatpush.msra.mxu0 %v25
  %52 = vmatmul.f32.gmra.mxu0 %v31
  %v53 = vpop.f32.mrf.mxu0
  %v54 = vadd.f32 0.0, %v53
  %55 = vmatmul.f32.gmra.mxu0 %v34
  %v56 = vpop.f32.mrf.mxu0
  %v57 = vadd.f32 0.0, %v56
  %58 = vdwg.mxu0
  %v59 = vadd.f32 %v21, %v54
  %v60 = vadd.f32 %v22, %v57
  %vm61 = vcmask 818176
  %62 = vst.msk [vmem:[#allocation2] sm:$0xff] %vm61, %v59
  %63 = vst.msk [vmem:[#allocation2 + $0x8] sm:$0xff] %vm61, %v60
  // Predicated region
  $region18: #{llama_forward.81} parent=0 // pred_check
    %p64 = pneg %p14
  $region19: #{llama_forward.81} parent=0 // pred_check_branch
    %66 = sbr.rel (%p64) target = $region21
  $region20: #{llama_forward.81} parent=0 // pred_region
    %v67 = vld [vmem:[#allocation2] sm:$0xff]
    %v68 = vld [vmem:[#allocation2 + $0x8] sm:$0xff]
    %v69 = vld [vmem:[%s2] sm:$0x1]
    %v71 = vperm.slane %v69, 0
    %v73 = vadd.f32 %v67, %v71
    %v74 = vadd.f32 %v68, %v71
    %75 = vst.msk [vmem:[%s3] sm:$0xff] %vm61, %v73
    %76 = vst.msk [vmem:[%s3 + $0x8] sm:$0xff] %vm61, %v74
  $region21: #{llama_forward.81} parent=0 // pred_fallthru
    _
  // Predicated region
  $region22: #{llama_forward.81} parent=0 // pred_check
    _
  $region23: #{llama_forward.81} parent=0 // pred_check_branch
    %78 = sbr.rel (0) target = $region25
  $region24: #{llama_forward.81} parent=0 // pred_region
    _
  $region25: #{llama_forward.81} parent=0 // pred_fallthru
    _
  // Predicated region
  $region26: #{llama_forward.81} parent=0 // pred_check
    _
  $region27: #{llama_forward.81} parent=0 // pred_check_branch
    %80 = sbr.rel (0) target = $region29
  $region28: #{llama_forward.81} parent=0 // pred_region
    _
  $region29: #{llama_forward.81} parent=0 // pred_fallthru
    _

</llo_original>
